<compile_context>
chip_gen: v7x
topology: tpu7x:2x2x1
jax: 0.10.0
libtpu: 0.0.40
codegen_flags: <defaults>
</compile_context>

<pallas_src>
import math

import jax
import jax.numpy as jnp
from jax import lax
from jax.experimental import pallas as pl
from jax.experimental.pallas import tpu as pltpu


def _round_up(x, m):
    return ((x + m - 1) // m) * m


# ----------------------------------------------------------------------------
# Fused kernel: one program per batch element, all heads inside.
# ----------------------------------------------------------------------------
def make_fused_attention_kernel(h, d_k, d_v):
    def kernel(q_ref, k_ref, v_ref,
               wq_ref, bq_ref, wk_ref, bk_ref, wv_ref, bv_ref,
               wo_ref, bo_ref, o_ref):
        xq = q_ref[0]                      # (nq, d_model)
        xk = k_ref[0]                      # (nk, d_model)
        xv = v_ref[0]                      # (nk, d_model)

        nq = xq.shape[0]
        d_out_pad = o_ref.shape[-1]        # multiple of 128 (lane-dense store)

        acc = jnp.zeros((nq, d_out_pad), jnp.float32)
        for hi in range(h):                # static unroll over heads
            # Per-head projections. Weights are pre-transposed to (d_model, d)
            # and 1/sqrt(d_k) is pre-folded into wq/bq -> no extra scaling here.
            qh = jnp.dot(xq, wq_ref[hi],
                         preferred_element_type=jnp.float32) + bq_ref[hi]
            kh = jnp.dot(xk, wk_ref[hi],
                         preferred_element_type=jnp.float32) + bk_ref[hi]
            vh = jnp.dot(xv, wv_ref[hi],
                         preferred_element_type=jnp.float32) + bv_ref[hi]

            # Scores: contract last dims of q and k (no in-kernel transpose).
            s = lax.dot_general(qh, kh,
                                dimension_numbers=(((1,), (1,)), ((), ())),
                                preferred_element_type=jnp.float32)   # (nq, nk)

            # Numerically stable softmax in f32; approx reciprocal -> EUP slot.
            s = s - jnp.max(s, axis=-1, keepdims=True)
            p = jnp.exp(s)
            p = p * pl.reciprocal(jnp.sum(p, axis=-1, keepdims=True), approx=True)

            oh = jnp.dot(p, vh, preferred_element_type=jnp.float32)   # (nq, d_v)

            # Fused "merge heads + fc_o": accumulate oh @ Wo_head.
            acc = acc + jnp.dot(oh, wo_ref[hi],
                                preferred_element_type=jnp.float32)

        o_ref[0] = (acc + bo_ref[...]).astype(o_ref.dtype)

    return kernel


# ----------------------------------------------------------------------------
# One-time parameter preparation (layout only: transpose, split per head,
# fold the 1/sqrt(d_k) scale, pad the output projection to a 128-lane width).
# ----------------------------------------------------------------------------
def prepare_params(params, d_model, d_k, d_v, h):
    d_out_pad = _round_up(d_model, 128)
    scale = 1.0 / math.sqrt(d_k)

    def per_head_in_out(w, dh):            # (h*dh, d_model) -> (h, d_model, dh)
        return jnp.transpose(w.reshape(h, dh, d_model), (0, 2, 1))

    wq = per_head_in_out(params["wq"], d_k) * scale
    bq = params["bq"].reshape(h, 1, d_k) * scale
    wk = per_head_in_out(params["wk"], d_k)
    bk = params["bk"].reshape(h, 1, d_k)
    wv = per_head_in_out(params["wv"], d_v)
    bv = params["bv"].reshape(h, 1, d_v)

    wo_t = params["wo"].T                                   # (h*d_v, d_model)
    wo_t = jnp.pad(wo_t, ((0, 0), (0, d_out_pad - d_model)))
    wo = wo_t.reshape(h, d_v, d_out_pad)                    # (h, d_v, d_out_pad)
    bo = jnp.pad(params["bo"].reshape(1, d_model),
                 ((0, 0), (0, d_out_pad - d_model)))        # (1, d_out_pad)

    return dict(wq=wq, bq=bq, wk=wk, bk=bk, wv=wv, bv=bv, wo=wo, bo=bo)


# ----------------------------------------------------------------------------
# Forward pass
# ----------------------------------------------------------------------------
def scaled_dot_product_attention(prepped, queries, keys, values,
                                 d_model, d_k, d_v, h):
    b_s, nq, _ = queries.shape
    nk = keys.shape[1]
    d_out_pad = prepped["wo"].shape[-1]

    out_pad = pl.pallas_call(
        make_fused_attention_kernel(h, d_k, d_v),
        out_shape=jax.ShapeDtypeStruct((b_s, nq, d_out_pad), queries.dtype),
        grid=(b_s,),
        in_specs=[
            pl.BlockSpec((1, nq, d_model), lambda b: (b, 0, 0)),
            pl.BlockSpec((1, nk, d_model), lambda b: (b, 0, 0)),
            pl.BlockSpec((1, nk, d_model), lambda b: (b, 0, 0)),
            pl.BlockSpec((h, d_model, d_k), lambda b: (0, 0, 0)),
            pl.BlockSpec((h, 1, d_k), lambda b: (0, 0, 0)),
            pl.BlockSpec((h, d_model, d_k), lambda b: (0, 0, 0)),
            pl.BlockSpec((h, 1, d_k), lambda b: (0, 0, 0)),
            pl.BlockSpec((h, d_model, d_v), lambda b: (0, 0, 0)),
            pl.BlockSpec((h, 1, d_v), lambda b: (0, 0, 0)),
            pl.BlockSpec((h, d_v, d_out_pad), lambda b: (0, 0, 0)),
            pl.BlockSpec((1, d_out_pad), lambda b: (0, 0)),
        ],
        out_specs=pl.BlockSpec((1, nq, d_out_pad), lambda b: (b, 0, 0)),
        compiler_params=pltpu.CompilerParams(
            dimension_semantics=("parallel",)),
    )(queries, keys, values,
      prepped["wq"], prepped["bq"], prepped["wk"], prepped["bk"],
      prepped["wv"], prepped["bv"], prepped["wo"], prepped["bo"])

    return out_pad[..., :d_model]


# ----------------------------------------------------------------------------
# Init (matches nn.Linear init in the module: weight std=0.001, bias=0)
# ----------------------------------------------------------------------------
def init_params(key, d_model, d_k, d_v, h):
    k1, k2, k3, k4 = jax.random.split(key, 4)
    std = 0.001
    return {
        "wq": jax.random.normal(k1, (h * d_k, d_model), jnp.float32) * std,
        "bq": jnp.zeros((h * d_k,), jnp.float32),
        "wk": jax.random.normal(k2, (h * d_k, d_model), jnp.float32) * std,
        "bk": jnp.zeros((h * d_k,), jnp.float32),
        "wv": jax.random.normal(k3, (h * d_v, d_model), jnp.float32) * std,
        "bv": jnp.zeros((h * d_v,), jnp.float32),
        "wo": jax.random.normal(k4, (d_model, h * d_v), jnp.float32) * std,
        "bo": jnp.zeros((d_model,), jnp.float32),
    }


# Pure-JAX reference (mirrors the PyTorch forward) for correctness checking
def reference(params, queries, keys, values, d_k, d_v, h):
    b_s, nq, d_model = queries.shape
    nk = keys.shape[1]
    q = queries @ params["wq"].T + params["bq"]
    k = keys @ params["wk"].T + params["bk"]
    v = values @ params["wv"].T + params["bv"]
    q = q.reshape(b_s, nq, h, d_k).transpose(0, 2, 1, 3)
    k = k.reshape(b_s, nk, h, d_k).transpose(0, 2, 3, 1)
    v = v.reshape(b_s, nk, h, d_v).transpose(0, 2, 1, 3)
    att = jnp.einsum("bhqd,bhdk->bhqk", q, k) / math.sqrt(d_k)
    att = jax.nn.softmax(att, axis=-1)
    out = jnp.einsum("bhqk,bhkd->bhqd", att, v)
    out = out.transpose(0, 2, 1, 3).reshape(b_s, nq, h * d_v)
    return out @ params["wo"].T + params["bo"]


if __name__ == "__main__":
    # small shapes consistent with the module's forward
    b_s, nq, nk = 2, 8, 8
    d_model, d_k, d_v, h = 32, 16, 16, 4

    key = jax.random.PRNGKey(0)
    kp, kq, kk, kv = jax.random.split(key, 4)
    params = init_params(kp, d_model, d_k, d_v, h)
    prepped = prepare_params(params, d_model, d_k, d_v, h)

    queries = jax.random.normal(kq, (b_s, nq, d_model), jnp.float32)
    keys = jax.random.normal(kk, (b_s, nk, d_model), jnp.float32)
    values = jax.random.normal(kv, (b_s, nk, d_model), jnp.float32)

    out = scaled_dot_product_attention(prepped, queries, keys, values,
                                       d_model, d_k, d_v, h)
    out = jax.block_until_ready(out)
    assert out.shape == (b_s, nq, d_model)

    ref = reference(params, queries, keys, values, d_k, d_v, h)
    rel_err = float(jnp.max(jnp.abs(out - ref)) /
                    (jnp.max(jnp.abs(ref)) + 1e-30))
    assert rel_err < 2e-3, f"mismatch vs reference: rel_err={rel_err:.3e}"

    print("KERNEL_OK")
</pallas_src>

<mosaic_0001>
module attributes {stable_mosaic.version = 11 : i64} {
  func.func @kernel(%arg0: i32, %arg1: memref<1x8x32xf32, #tpu.memory_space<vmem>>, %arg2: memref<1x8x32xf32, #tpu.memory_space<vmem>>, %arg3: memref<1x8x32xf32, #tpu.memory_space<vmem>>, %arg4: memref<4x32x16xf32, #tpu.memory_space<vmem>>, %arg5: memref<4x1x16xf32, #tpu.memory_space<vmem>>, %arg6: memref<4x32x16xf32, #tpu.memory_space<vmem>>, %arg7: memref<4x1x16xf32, #tpu.memory_space<vmem>>, %arg8: memref<4x32x16xf32, #tpu.memory_space<vmem>>, %arg9: memref<4x1x16xf32, #tpu.memory_space<vmem>>, %arg10: memref<4x16x128xf32, #tpu.memory_space<vmem>>, %arg11: memref<1x128xf32, #tpu.memory_space<vmem>>, %arg12: memref<1x8x128xf32, #tpu.memory_space<vmem>>) attributes {dimension_semantics = [#tpu.dimension_semantics<parallel>], iteration_bounds = array<i64: 2>, scalar_prefetch = 0 : i64, scratch_operands = 0 : i64, tpu.core_type = #tpu.core_type<tc>, window_params = [{transform_indices = @transform_0, window_bounds = array<i64: 1, 8, 32>}, {transform_indices = @transform_1, window_bounds = array<i64: 1, 8, 32>}, {transform_indices = @transform_2, window_bounds = array<i64: 1, 8, 32>}, {pipeline_mode = #tpu.pipeline_mode<synchronous>, transform_indices = @transform_3, window_bounds = array<i64: 4, 32, 16>}, {pipeline_mode = #tpu.pipeline_mode<synchronous>, transform_indices = @transform_4, window_bounds = array<i64: 4, 1, 16>}, {pipeline_mode = #tpu.pipeline_mode<synchronous>, transform_indices = @transform_5, window_bounds = array<i64: 4, 32, 16>}, {pipeline_mode = #tpu.pipeline_mode<synchronous>, transform_indices = @transform_6, window_bounds = array<i64: 4, 1, 16>}, {pipeline_mode = #tpu.pipeline_mode<synchronous>, transform_indices = @transform_7, window_bounds = array<i64: 4, 32, 16>}, {pipeline_mode = #tpu.pipeline_mode<synchronous>, transform_indices = @transform_8, window_bounds = array<i64: 4, 1, 16>}, {pipeline_mode = #tpu.pipeline_mode<synchronous>, transform_indices = @transform_9, window_bounds = array<i64: 4, 16, 128>}, {pipeline_mode = #tpu.pipeline_mode<synchronous>, transform_indices = @transform_10, window_bounds = array<i64: 1, 128>}, {transform_indices = @transform_11, window_bounds = array<i64: 1, 8, 128>}]} {
    %c0 = arith.constant 0 : index
    %c0_0 = arith.constant 0 : index
    %c0_1 = arith.constant 0 : index
    %0 = vector.load %arg1[%c0, %c0_0, %c0_1] : memref<1x8x32xf32, #tpu.memory_space<vmem>>, vector<1x8x32xf32>
    %1 = vector.shape_cast %0 : vector<1x8x32xf32> to vector<8x32xf32>
    %c0_2 = arith.constant 0 : index
    %c0_3 = arith.constant 0 : index
    %c0_4 = arith.constant 0 : index
    %2 = vector.load %arg2[%c0_2, %c0_3, %c0_4] : memref<1x8x32xf32, #tpu.memory_space<vmem>>, vector<1x8x32xf32>
    %3 = vector.shape_cast %2 : vector<1x8x32xf32> to vector<8x32xf32>
    %c0_5 = arith.constant 0 : index
    %c0_6 = arith.constant 0 : index
    %c0_7 = arith.constant 0 : index
    %4 = vector.load %arg3[%c0_5, %c0_6, %c0_7] : memref<1x8x32xf32, #tpu.memory_space<vmem>>, vector<1x8x32xf32>
    %5 = vector.shape_cast %4 : vector<1x8x32xf32> to vector<8x32xf32>
    %cst = arith.constant 0.000000e+00 : f32
    %6 = vector.broadcast %cst : f32 to vector<8x128xf32>
    %c0_8 = arith.constant 0 : index
    %c0_9 = arith.constant 0 : index
    %c0_10 = arith.constant 0 : index
    %7 = vector.load %arg4[%c0_8, %c0_9, %c0_10] : memref<4x32x16xf32, #tpu.memory_space<vmem>>, vector<1x32x16xf32>
    %8 = vector.shape_cast %7 : vector<1x32x16xf32> to vector<32x16xf32>
    %cst_11 = arith.constant dense<0.000000e+00> : vector<8x16xf32>
    %9 = tpu.matmul %1, %8, %cst_11 {dimension_numbers = #tpu.dot_dimension_numbers<[1], [0], [0], [1], [0, 0, 1, 1], [], []>} : vector<8x32xf32>, vector<32x16xf32>, vector<8x16xf32> -> vector<8x16xf32>
    %c0_12 = arith.constant 0 : index
    %c0_13 = arith.constant 0 : index
    %c0_14 = arith.constant 0 : index
    %10 = vector.load %arg5[%c0_12, %c0_13, %c0_14] : memref<4x1x16xf32, #tpu.memory_space<vmem>>, vector<1x1x16xf32>
    %11 = vector.shape_cast %10 : vector<1x1x16xf32> to vector<1x16xf32>
    %12 = vector.broadcast %11 : vector<1x16xf32> to vector<8x16xf32>
    %13 = arith.addf %9, %12 : vector<8x16xf32>
    %c0_15 = arith.constant 0 : index
    %c0_16 = arith.constant 0 : index
    %c0_17 = arith.constant 0 : index
    %14 = vector.load %arg6[%c0_15, %c0_16, %c0_17] : memref<4x32x16xf32, #tpu.memory_space<vmem>>, vector<1x32x16xf32>
    %15 = vector.shape_cast %14 : vector<1x32x16xf32> to vector<32x16xf32>
    %cst_18 = arith.constant dense<0.000000e+00> : vector<8x16xf32>
    %16 = tpu.matmul %3, %15, %cst_18 {dimension_numbers = #tpu.dot_dimension_numbers<[1], [0], [0], [1], [0, 0, 1, 1], [], []>} : vector<8x32xf32>, vector<32x16xf32>, vector<8x16xf32> -> vector<8x16xf32>
    %c0_19 = arith.constant 0 : index
    %c0_20 = arith.constant 0 : index
    %c0_21 = arith.constant 0 : index
    %17 = vector.load %arg7[%c0_19, %c0_20, %c0_21] : memref<4x1x16xf32, #tpu.memory_space<vmem>>, vector<1x1x16xf32>
    %18 = vector.shape_cast %17 : vector<1x1x16xf32> to vector<1x16xf32>
    %19 = vector.broadcast %18 : vector<1x16xf32> to vector<8x16xf32>
    %20 = arith.addf %16, %19 : vector<8x16xf32>
    %c0_22 = arith.constant 0 : index
    %c0_23 = arith.constant 0 : index
    %c0_24 = arith.constant 0 : index
    %21 = vector.load %arg8[%c0_22, %c0_23, %c0_24] : memref<4x32x16xf32, #tpu.memory_space<vmem>>, vector<1x32x16xf32>
    %22 = vector.shape_cast %21 : vector<1x32x16xf32> to vector<32x16xf32>
    %cst_25 = arith.constant dense<0.000000e+00> : vector<8x16xf32>
    %23 = tpu.matmul %5, %22, %cst_25 {dimension_numbers = #tpu.dot_dimension_numbers<[1], [0], [0], [1], [0, 0, 1, 1], [], []>} : vector<8x32xf32>, vector<32x16xf32>, vector<8x16xf32> -> vector<8x16xf32>
    %c0_26 = arith.constant 0 : index
    %c0_27 = arith.constant 0 : index
    %c0_28 = arith.constant 0 : index
    %24 = vector.load %arg9[%c0_26, %c0_27, %c0_28] : memref<4x1x16xf32, #tpu.memory_space<vmem>>, vector<1x1x16xf32>
    %25 = vector.shape_cast %24 : vector<1x1x16xf32> to vector<1x16xf32>
    %26 = vector.broadcast %25 : vector<1x16xf32> to vector<8x16xf32>
    %27 = arith.addf %23, %26 : vector<8x16xf32>
    %cst_29 = arith.constant dense<0.000000e+00> : vector<8x8xf32>
    %28 = tpu.matmul %13, %20, %cst_29 {dimension_numbers = #tpu.dot_dimension_numbers<[1], [1], [0], [0], [0, 0, 1, 0], [], []>} : vector<8x16xf32>, vector<8x16xf32>, vector<8x8xf32> -> vector<8x8xf32>
    %cst_30 = arith.constant dense<0xFF800000> : vector<8xf32>
    %29 = vector.multi_reduction <maximumf>, %28, %cst_30 [1] : vector<8x8xf32> to vector<8xf32>
    %30 = vector.shape_cast %29 : vector<8xf32> to vector<8x1xf32>
    %31 = vector.broadcast %30 : vector<8x1xf32> to vector<8x8xf32>
    %32 = arith.subf %28, %31 : vector<8x8xf32>
    %33 = math.exp %32 : vector<8x8xf32>
    %cst_31 = arith.constant dense<0.000000e+00> : vector<8xf32>
    %34 = vector.multi_reduction <add>, %33, %cst_31 [1] : vector<8x8xf32> to vector<8xf32>
    %35 = vector.shape_cast %34 : vector<8xf32> to vector<8x1xf32>
    %36 = tpu.reciprocal %35 {approx = true} : vector<8x1xf32> -> vector<8x1xf32>
    %37 = vector.broadcast %36 : vector<8x1xf32> to vector<8x8xf32>
    %38 = arith.mulf %33, %37 : vector<8x8xf32>
    %cst_32 = arith.constant dense<0.000000e+00> : vector<8x16xf32>
    %39 = tpu.matmul %38, %27, %cst_32 {dimension_numbers = #tpu.dot_dimension_numbers<[1], [0], [0], [1], [0, 0, 1, 1], [], []>} : vector<8x8xf32>, vector<8x16xf32>, vector<8x16xf32> -> vector<8x16xf32>
    %c0_33 = arith.constant 0 : index
    %c0_34 = arith.constant 0 : index
    %c0_35 = arith.constant 0 : index
    %40 = vector.load %arg10[%c0_33, %c0_34, %c0_35] : memref<4x16x128xf32, #tpu.memory_space<vmem>>, vector<1x16x128xf32>
    %41 = vector.shape_cast %40 : vector<1x16x128xf32> to vector<16x128xf32>
    %cst_36 = arith.constant dense<0.000000e+00> : vector<8x128xf32>
    %42 = tpu.matmul %39, %41, %cst_36 {dimension_numbers = #tpu.dot_dimension_numbers<[1], [0], [0], [1], [0, 0, 1, 1], [], []>} : vector<8x16xf32>, vector<16x128xf32>, vector<8x128xf32> -> vector<8x128xf32>
    %43 = arith.addf %6, %42 : vector<8x128xf32>
    %c1 = arith.constant 1 : index
    %c0_37 = arith.constant 0 : index
    %c0_38 = arith.constant 0 : index
    %44 = vector.load %arg4[%c1, %c0_37, %c0_38] : memref<4x32x16xf32, #tpu.memory_space<vmem>>, vector<1x32x16xf32>
    %45 = vector.shape_cast %44 : vector<1x32x16xf32> to vector<32x16xf32>
    %cst_39 = arith.constant dense<0.000000e+00> : vector<8x16xf32>
    %46 = tpu.matmul %1, %45, %cst_39 {dimension_numbers = #tpu.dot_dimension_numbers<[1], [0], [0], [1], [0, 0, 1, 1], [], []>} : vector<8x32xf32>, vector<32x16xf32>, vector<8x16xf32> -> vector<8x16xf32>
    %c1_40 = arith.constant 1 : index
    %c0_41 = arith.constant 0 : index
    %c0_42 = arith.constant 0 : index
    %47 = vector.load %arg5[%c1_40, %c0_41, %c0_42] : memref<4x1x16xf32, #tpu.memory_space<vmem>>, vector<1x1x16xf32>
    %48 = vector.shape_cast %47 : vector<1x1x16xf32> to vector<1x16xf32>
    %49 = vector.broadcast %48 : vector<1x16xf32> to vector<8x16xf32>
    %50 = arith.addf %46, %49 : vector<8x16xf32>
    %c1_43 = arith.constant 1 : index
    %c0_44 = arith.constant 0 : index
    %c0_45 = arith.constant 0 : index
    %51 = vector.load %arg6[%c1_43, %c0_44, %c0_45] : memref<4x32x16xf32, #tpu.memory_space<vmem>>, vector<1x32x16xf32>
    %52 = vector.shape_cast %51 : vector<1x32x16xf32> to vector<32x16xf32>
    %cst_46 = arith.constant dense<0.000000e+00> : vector<8x16xf32>
    %53 = tpu.matmul %3, %52, %cst_46 {dimension_numbers = #tpu.dot_dimension_numbers<[1], [0], [0], [1], [0, 0, 1, 1], [], []>} : vector<8x32xf32>, vector<32x16xf32>, vector<8x16xf32> -> vector<8x16xf32>
    %c1_47 = arith.constant 1 : index
    %c0_48 = arith.constant 0 : index
    %c0_49 = arith.constant 0 : index
    %54 = vector.load %arg7[%c1_47, %c0_48, %c0_49] : memref<4x1x16xf32, #tpu.memory_space<vmem>>, vector<1x1x16xf32>
    %55 = vector.shape_cast %54 : vector<1x1x16xf32> to vector<1x16xf32>
    %56 = vector.broadcast %55 : vector<1x16xf32> to vector<8x16xf32>
    %57 = arith.addf %53, %56 : vector<8x16xf32>
    %c1_50 = arith.constant 1 : index
    %c0_51 = arith.constant 0 : index
    %c0_52 = arith.constant 0 : index
    %58 = vector.load %arg8[%c1_50, %c0_51, %c0_52] : memref<4x32x16xf32, #tpu.memory_space<vmem>>, vector<1x32x16xf32>
    %59 = vector.shape_cast %58 : vector<1x32x16xf32> to vector<32x16xf32>
    %cst_53 = arith.constant dense<0.000000e+00> : vector<8x16xf32>
    %60 = tpu.matmul %5, %59, %cst_53 {dimension_numbers = #tpu.dot_dimension_numbers<[1], [0], [0], [1], [0, 0, 1, 1], [], []>} : vector<8x32xf32>, vector<32x16xf32>, vector<8x16xf32> -> vector<8x16xf32>
    %c1_54 = arith.constant 1 : index
    %c0_55 = arith.constant 0 : index
    %c0_56 = arith.constant 0 : index
    %61 = vector.load %arg9[%c1_54, %c0_55, %c0_56] : memref<4x1x16xf32, #tpu.memory_space<vmem>>, vector<1x1x16xf32>
    %62 = vector.shape_cast %61 : vector<1x1x16xf32> to vector<1x16xf32>
    %63 = vector.broadcast %62 : vector<1x16xf32> to vector<8x16xf32>
    %64 = arith.addf %60, %63 : vector<8x16xf32>
    %cst_57 = arith.constant dense<0.000000e+00> : vector<8x8xf32>
    %65 = tpu.matmul %50, %57, %cst_57 {dimension_numbers = #tpu.dot_dimension_numbers<[1], [1], [0], [0], [0, 0, 1, 0], [], []>} : vector<8x16xf32>, vector<8x16xf32>, vector<8x8xf32> -> vector<8x8xf32>
    %cst_58 = arith.constant dense<0xFF800000> : vector<8xf32>
    %66 = vector.multi_reduction <maximumf>, %65, %cst_58 [1] : vector<8x8xf32> to vector<8xf32>
    %67 = vector.shape_cast %66 : vector<8xf32> to vector<8x1xf32>
    %68 = vector.broadcast %67 : vector<8x1xf32> to vector<8x8xf32>
    %69 = arith.subf %65, %68 : vector<8x8xf32>
    %70 = math.exp %69 : vector<8x8xf32>
    %cst_59 = arith.constant dense<0.000000e+00> : vector<8xf32>
    %71 = vector.multi_reduction <add>, %70, %cst_59 [1] : vector<8x8xf32> to vector<8xf32>
    %72 = vector.shape_cast %71 : vector<8xf32> to vector<8x1xf32>
    %73 = tpu.reciprocal %72 {approx = true} : vector<8x1xf32> -> vector<8x1xf32>
    %74 = vector.broadcast %73 : vector<8x1xf32> to vector<8x8xf32>
    %75 = arith.mulf %70, %74 : vector<8x8xf32>
    %cst_60 = arith.constant dense<0.000000e+00> : vector<8x16xf32>
    %76 = tpu.matmul %75, %64, %cst_60 {dimension_numbers = #tpu.dot_dimension_numbers<[1], [0], [0], [1], [0, 0, 1, 1], [], []>} : vector<8x8xf32>, vector<8x16xf32>, vector<8x16xf32> -> vector<8x16xf32>
    %c1_61 = arith.constant 1 : index
    %c0_62 = arith.constant 0 : index
    %c0_63 = arith.constant 0 : index
    %77 = vector.load %arg10[%c1_61, %c0_62, %c0_63] : memref<4x16x128xf32, #tpu.memory_space<vmem>>, vector<1x16x128xf32>
    %78 = vector.shape_cast %77 : vector<1x16x128xf32> to vector<16x128xf32>
    %cst_64 = arith.constant dense<0.000000e+00> : vector<8x128xf32>
    %79 = tpu.matmul %76, %78, %cst_64 {dimension_numbers = #tpu.dot_dimension_numbers<[1], [0], [0], [1], [0, 0, 1, 1], [], []>} : vector<8x16xf32>, vector<16x128xf32>, vector<8x128xf32> -> vector<8x128xf32>
    %80 = arith.addf %43, %79 : vector<8x128xf32>
    %c2 = arith.constant 2 : index
    %c0_65 = arith.constant 0 : index
    %c0_66 = arith.constant 0 : index
    %81 = vector.load %arg4[%c2, %c0_65, %c0_66] : memref<4x32x16xf32, #tpu.memory_space<vmem>>, vector<1x32x16xf32>
    %82 = vector.shape_cast %81 : vector<1x32x16xf32> to vector<32x16xf32>
    %cst_67 = arith.constant dense<0.000000e+00> : vector<8x16xf32>
    %83 = tpu.matmul %1, %82, %cst_67 {dimension_numbers = #tpu.dot_dimension_numbers<[1], [0], [0], [1], [0, 0, 1, 1], [], []>} : vector<8x32xf32>, vector<32x16xf32>, vector<8x16xf32> -> vector<8x16xf32>
    %c2_68 = arith.constant 2 : index
    %c0_69 = arith.constant 0 : index
    %c0_70 = arith.constant 0 : index
    %84 = vector.load %arg5[%c2_68, %c0_69, %c0_70] : memref<4x1x16xf32, #tpu.memory_space<vmem>>, vector<1x1x16xf32>
    %85 = vector.shape_cast %84 : vector<1x1x16xf32> to vector<1x16xf32>
    %86 = vector.broadcast %85 : vector<1x16xf32> to vector<8x16xf32>
    %87 = arith.addf %83, %86 : vector<8x16xf32>
    %c2_71 = arith.constant 2 : index
    %c0_72 = arith.constant 0 : index
    %c0_73 = arith.constant 0 : index
    %88 = vector.load %arg6[%c2_71, %c0_72, %c0_73] : memref<4x32x16xf32, #tpu.memory_space<vmem>>, vector<1x32x16xf32>
    %89 = vector.shape_cast %88 : vector<1x32x16xf32> to vector<32x16xf32>
    %cst_74 = arith.constant dense<0.000000e+00> : vector<8x16xf32>
    %90 = tpu.matmul %3, %89, %cst_74 {dimension_numbers = #tpu.dot_dimension_numbers<[1], [0], [0], [1], [0, 0, 1, 1], [], []>} : vector<8x32xf32>, vector<32x16xf32>, vector<8x16xf32> -> vector<8x16xf32>
    %c2_75 = arith.constant 2 : index
    %c0_76 = arith.constant 0 : index
    %c0_77 = arith.constant 0 : index
    %91 = vector.load %arg7[%c2_75, %c0_76, %c0_77] : memref<4x1x16xf32, #tpu.memory_space<vmem>>, vector<1x1x16xf32>
    %92 = vector.shape_cast %91 : vector<1x1x16xf32> to vector<1x16xf32>
    %93 = vector.broadcast %92 : vector<1x16xf32> to vector<8x16xf32>
    %94 = arith.addf %90, %93 : vector<8x16xf32>
    %c2_78 = arith.constant 2 : index
    %c0_79 = arith.constant 0 : index
    %c0_80 = arith.constant 0 : index
    %95 = vector.load %arg8[%c2_78, %c0_79, %c0_80] : memref<4x32x16xf32, #tpu.memory_space<vmem>>, vector<1x32x16xf32>
    %96 = vector.shape_cast %95 : vector<1x32x16xf32> to vector<32x16xf32>
    %cst_81 = arith.constant dense<0.000000e+00> : vector<8x16xf32>
    %97 = tpu.matmul %5, %96, %cst_81 {dimension_numbers = #tpu.dot_dimension_numbers<[1], [0], [0], [1], [0, 0, 1, 1], [], []>} : vector<8x32xf32>, vector<32x16xf32>, vector<8x16xf32> -> vector<8x16xf32>
    %c2_82 = arith.constant 2 : index
    %c0_83 = arith.constant 0 : index
    %c0_84 = arith.constant 0 : index
    %98 = vector.load %arg9[%c2_82, %c0_83, %c0_84] : memref<4x1x16xf32, #tpu.memory_space<vmem>>, vector<1x1x16xf32>
    %99 = vector.shape_cast %98 : vector<1x1x16xf32> to vector<1x16xf32>
    %100 = vector.broadcast %99 : vector<1x16xf32> to vector<8x16xf32>
    %101 = arith.addf %97, %100 : vector<8x16xf32>
    %cst_85 = arith.constant dense<0.000000e+00> : vector<8x8xf32>
    %102 = tpu.matmul %87, %94, %cst_85 {dimension_numbers = #tpu.dot_dimension_numbers<[1], [1], [0], [0], [0, 0, 1, 0], [], []>} : vector<8x16xf32>, vector<8x16xf32>, vector<8x8xf32> -> vector<8x8xf32>
    %cst_86 = arith.constant dense<0xFF800000> : vector<8xf32>
    %103 = vector.multi_reduction <maximumf>, %102, %cst_86 [1] : vector<8x8xf32> to vector<8xf32>
    %104 = vector.shape_cast %103 : vector<8xf32> to vector<8x1xf32>
    %105 = vector.broadcast %104 : vector<8x1xf32> to vector<8x8xf32>
    %106 = arith.subf %102, %105 : vector<8x8xf32>
    %107 = math.exp %106 : vector<8x8xf32>
    %cst_87 = arith.constant dense<0.000000e+00> : vector<8xf32>
    %108 = vector.multi_reduction <add>, %107, %cst_87 [1] : vector<8x8xf32> to vector<8xf32>
    %109 = vector.shape_cast %108 : vector<8xf32> to vector<8x1xf32>
    %110 = tpu.reciprocal %109 {approx = true} : vector<8x1xf32> -> vector<8x1xf32>
    %111 = vector.broadcast %110 : vector<8x1xf32> to vector<8x8xf32>
    %112 = arith.mulf %107, %111 : vector<8x8xf32>
    %cst_88 = arith.constant dense<0.000000e+00> : vector<8x16xf32>
    %113 = tpu.matmul %112, %101, %cst_88 {dimension_numbers = #tpu.dot_dimension_numbers<[1], [0], [0], [1], [0, 0, 1, 1], [], []>} : vector<8x8xf32>, vector<8x16xf32>, vector<8x16xf32> -> vector<8x16xf32>
    %c2_89 = arith.constant 2 : index
    %c0_90 = arith.constant 0 : index
    %c0_91 = arith.constant 0 : index
    %114 = vector.load %arg10[%c2_89, %c0_90, %c0_91] : memref<4x16x128xf32, #tpu.memory_space<vmem>>, vector<1x16x128xf32>
    %115 = vector.shape_cast %114 : vector<1x16x128xf32> to vector<16x128xf32>
    %cst_92 = arith.constant dense<0.000000e+00> : vector<8x128xf32>
    %116 = tpu.matmul %113, %115, %cst_92 {dimension_numbers = #tpu.dot_dimension_numbers<[1], [0], [0], [1], [0, 0, 1, 1], [], []>} : vector<8x16xf32>, vector<16x128xf32>, vector<8x128xf32> -> vector<8x128xf32>
    %117 = arith.addf %80, %116 : vector<8x128xf32>
    %c3 = arith.constant 3 : index
    %c0_93 = arith.constant 0 : index
    %c0_94 = arith.constant 0 : index
    %118 = vector.load %arg4[%c3, %c0_93, %c0_94] : memref<4x32x16xf32, #tpu.memory_space<vmem>>, vector<1x32x16xf32>
    %119 = vector.shape_cast %118 : vector<1x32x16xf32> to vector<32x16xf32>
    %cst_95 = arith.constant dense<0.000000e+00> : vector<8x16xf32>
    %120 = tpu.matmul %1, %119, %cst_95 {dimension_numbers = #tpu.dot_dimension_numbers<[1], [0], [0], [1], [0, 0, 1, 1], [], []>} : vector<8x32xf32>, vector<32x16xf32>, vector<8x16xf32> -> vector<8x16xf32>
    %c3_96 = arith.constant 3 : index
    %c0_97 = arith.constant 0 : index
    %c0_98 = arith.constant 0 : index
    %121 = vector.load %arg5[%c3_96, %c0_97, %c0_98] : memref<4x1x16xf32, #tpu.memory_space<vmem>>, vector<1x1x16xf32>
    %122 = vector.shape_cast %121 : vector<1x1x16xf32> to vector<1x16xf32>
    %123 = vector.broadcast %122 : vector<1x16xf32> to vector<8x16xf32>
    %124 = arith.addf %120, %123 : vector<8x16xf32>
    %c3_99 = arith.constant 3 : index
    %c0_100 = arith.constant 0 : index
    %c0_101 = arith.constant 0 : index
    %125 = vector.load %arg6[%c3_99, %c0_100, %c0_101] : memref<4x32x16xf32, #tpu.memory_space<vmem>>, vector<1x32x16xf32>
    %126 = vector.shape_cast %125 : vector<1x32x16xf32> to vector<32x16xf32>
    %cst_102 = arith.constant dense<0.000000e+00> : vector<8x16xf32>
    %127 = tpu.matmul %3, %126, %cst_102 {dimension_numbers = #tpu.dot_dimension_numbers<[1], [0], [0], [1], [0, 0, 1, 1], [], []>} : vector<8x32xf32>, vector<32x16xf32>, vector<8x16xf32> -> vector<8x16xf32>
    %c3_103 = arith.constant 3 : index
    %c0_104 = arith.constant 0 : index
    %c0_105 = arith.constant 0 : index
    %128 = vector.load %arg7[%c3_103, %c0_104, %c0_105] : memref<4x1x16xf32, #tpu.memory_space<vmem>>, vector<1x1x16xf32>
    %129 = vector.shape_cast %128 : vector<1x1x16xf32> to vector<1x16xf32>
    %130 = vector.broadcast %129 : vector<1x16xf32> to vector<8x16xf32>
    %131 = arith.addf %127, %130 : vector<8x16xf32>
    %c3_106 = arith.constant 3 : index
    %c0_107 = arith.constant 0 : index
    %c0_108 = arith.constant 0 : index
    %132 = vector.load %arg8[%c3_106, %c0_107, %c0_108] : memref<4x32x16xf32, #tpu.memory_space<vmem>>, vector<1x32x16xf32>
    %133 = vector.shape_cast %132 : vector<1x32x16xf32> to vector<32x16xf32>
    %cst_109 = arith.constant dense<0.000000e+00> : vector<8x16xf32>
    %134 = tpu.matmul %5, %133, %cst_109 {dimension_numbers = #tpu.dot_dimension_numbers<[1], [0], [0], [1], [0, 0, 1, 1], [], []>} : vector<8x32xf32>, vector<32x16xf32>, vector<8x16xf32> -> vector<8x16xf32>
    %c3_110 = arith.constant 3 : index
    %c0_111 = arith.constant 0 : index
    %c0_112 = arith.constant 0 : index
    %135 = vector.load %arg9[%c3_110, %c0_111, %c0_112] : memref<4x1x16xf32, #tpu.memory_space<vmem>>, vector<1x1x16xf32>
    %136 = vector.shape_cast %135 : vector<1x1x16xf32> to vector<1x16xf32>
    %137 = vector.broadcast %136 : vector<1x16xf32> to vector<8x16xf32>
    %138 = arith.addf %134, %137 : vector<8x16xf32>
    %cst_113 = arith.constant dense<0.000000e+00> : vector<8x8xf32>
    %139 = tpu.matmul %124, %131, %cst_113 {dimension_numbers = #tpu.dot_dimension_numbers<[1], [1], [0], [0], [0, 0, 1, 0], [], []>} : vector<8x16xf32>, vector<8x16xf32>, vector<8x8xf32> -> vector<8x8xf32>
    %cst_114 = arith.constant dense<0xFF800000> : vector<8xf32>
    %140 = vector.multi_reduction <maximumf>, %139, %cst_114 [1] : vector<8x8xf32> to vector<8xf32>
    %141 = vector.shape_cast %140 : vector<8xf32> to vector<8x1xf32>
    %142 = vector.broadcast %141 : vector<8x1xf32> to vector<8x8xf32>
    %143 = arith.subf %139, %142 : vector<8x8xf32>
    %144 = math.exp %143 : vector<8x8xf32>
    %cst_115 = arith.constant dense<0.000000e+00> : vector<8xf32>
    %145 = vector.multi_reduction <add>, %144, %cst_115 [1] : vector<8x8xf32> to vector<8xf32>
    %146 = vector.shape_cast %145 : vector<8xf32> to vector<8x1xf32>
    %147 = tpu.reciprocal %146 {approx = true} : vector<8x1xf32> -> vector<8x1xf32>
    %148 = vector.broadcast %147 : vector<8x1xf32> to vector<8x8xf32>
    %149 = arith.mulf %144, %148 : vector<8x8xf32>
    %cst_116 = arith.constant dense<0.000000e+00> : vector<8x16xf32>
    %150 = tpu.matmul %149, %138, %cst_116 {dimension_numbers = #tpu.dot_dimension_numbers<[1], [0], [0], [1], [0, 0, 1, 1], [], []>} : vector<8x8xf32>, vector<8x16xf32>, vector<8x16xf32> -> vector<8x16xf32>
    %c3_117 = arith.constant 3 : index
    %c0_118 = arith.constant 0 : index
    %c0_119 = arith.constant 0 : index
    %151 = vector.load %arg10[%c3_117, %c0_118, %c0_119] : memref<4x16x128xf32, #tpu.memory_space<vmem>>, vector<1x16x128xf32>
    %152 = vector.shape_cast %151 : vector<1x16x128xf32> to vector<16x128xf32>
    %cst_120 = arith.constant dense<0.000000e+00> : vector<8x128xf32>
    %153 = tpu.matmul %150, %152, %cst_120 {dimension_numbers = #tpu.dot_dimension_numbers<[1], [0], [0], [1], [0, 0, 1, 1], [], []>} : vector<8x16xf32>, vector<16x128xf32>, vector<8x128xf32> -> vector<8x128xf32>
    %154 = arith.addf %117, %153 : vector<8x128xf32>
    %c0_121 = arith.constant 0 : index
    %c0_122 = arith.constant 0 : index
    %155 = vector.load %arg11[%c0_121, %c0_122] : memref<1x128xf32, #tpu.memory_space<vmem>>, vector<1x128xf32>
    %156 = vector.broadcast %155 : vector<1x128xf32> to vector<8x128xf32>
    %157 = arith.addf %154, %156 : vector<8x128xf32>
    %c0_123 = arith.constant 0 : index
    %c0_124 = arith.constant 0 : index
    %c0_125 = arith.constant 0 : index
    %158 = vector.load %arg12[%c0_123, %c0_124, %c0_125] : memref<1x8x128xf32, #tpu.memory_space<vmem>>, vector<1x8x128xf32>
    %159 = vector.shape_cast %158 : vector<1x8x128xf32> to vector<8x128xf32>
    %160 = vector.shape_cast %157 : vector<8x128xf32> to vector<1x8x128xf32>
    tpu.vector_store %arg12[%c0_123, %c0_124, %c0_125], %160 {strides = array<i32>} : memref<1x8x128xf32, #tpu.memory_space<vmem>>, vector<1x8x128xf32>,
    return
  }
  func.func @transform_0(%arg0: i32) -> (i32, i32, i32) {
    %c0_i32 = arith.constant 0 : i32
    %c0_i32_0 = arith.constant 0 : i32
    %c0_i32_1 = arith.constant 0 : i32
    return %arg0, %c0_i32, %c0_i32_0 : i32, i32, i32
  }
  func.func @transform_1(%arg0: i32) -> (i32, i32, i32) {
    %c0_i32 = arith.constant 0 : i32
    %c0_i32_0 = arith.constant 0 : i32
    %c0_i32_1 = arith.constant 0 : i32
    return %arg0, %c0_i32, %c0_i32_0 : i32, i32, i32
  }
  func.func @transform_2(%arg0: i32) -> (i32, i32, i32) {
    %c0_i32 = arith.constant 0 : i32
    %c0_i32_0 = arith.constant 0 : i32
    %c0_i32_1 = arith.constant 0 : i32
    return %arg0, %c0_i32, %c0_i32_0 : i32, i32, i32
  }
  func.func @transform_3(%arg0: i32) -> (i32, i32, i32) {
    %c0_i32 = arith.constant 0 : i32
    %c0_i32_0 = arith.constant 0 : i32
    %c0_i32_1 = arith.constant 0 : i32
    %c0_i32_2 = arith.constant 0 : i32
    return %c0_i32, %c0_i32_0, %c0_i32_1 : i32, i32, i32
  }
  func.func @transform_4(%arg0: i32) -> (i32, i32, i32) {
    %c0_i32 = arith.constant 0 : i32
    %c0_i32_0 = arith.constant 0 : i32
    %c0_i32_1 = arith.constant 0 : i32
    %c0_i32_2 = arith.constant 0 : i32
    return %c0_i32, %c0_i32_0, %c0_i32_1 : i32, i32, i32
  }
  func.func @transform_5(%arg0: i32) -> (i32, i32, i32) {
    %c0_i32 = arith.constant 0 : i32
    %c0_i32_0 = arith.constant 0 : i32
    %c0_i32_1 = arith.constant 0 : i32
    %c0_i32_2 = arith.constant 0 : i32
    return %c0_i32, %c0_i32_0, %c0_i32_1 : i32, i32, i32
  }
  func.func @transform_6(%arg0: i32) -> (i32, i32, i32) {
    %c0_i32 = arith.constant 0 : i32
    %c0_i32_0 = arith.constant 0 : i32
    %c0_i32_1 = arith.constant 0 : i32
    %c0_i32_2 = arith.constant 0 : i32
    return %c0_i32, %c0_i32_0, %c0_i32_1 : i32, i32, i32
  }
  func.func @transform_7(%arg0: i32) -> (i32, i32, i32) {
    %c0_i32 = arith.constant 0 : i32
    %c0_i32_0 = arith.constant 0 : i32
    %c0_i32_1 = arith.constant 0 : i32
    %c0_i32_2 = arith.constant 0 : i32
    return %c0_i32, %c0_i32_0, %c0_i32_1 : i32, i32, i32
  }
  func.func @transform_8(%arg0: i32) -> (i32, i32, i32) {
    %c0_i32 = arith.constant 0 : i32
    %c0_i32_0 = arith.constant 0 : i32
    %c0_i32_1 = arith.constant 0 : i32
    %c0_i32_2 = arith.constant 0 : i32
    return %c0_i32, %c0_i32_0, %c0_i32_1 : i32, i32, i32
  }
  func.func @transform_9(%arg0: i32) -> (i32, i32, i32) {
    %c0_i32 = arith.constant 0 : i32
    %c0_i32_0 = arith.constant 0 : i32
    %c0_i32_1 = arith.constant 0 : i32
    %c0_i32_2 = arith.constant 0 : i32
    return %c0_i32, %c0_i32_0, %c0_i32_1 : i32, i32, i32
  }
  func.func @transform_10(%arg0: i32) -> (i32, i32) {
    %c0_i32 = arith.constant 0 : i32
    %c0_i32_0 = arith.constant 0 : i32
    %c0_i32_1 = arith.constant 0 : i32
    return %c0_i32, %c0_i32_0 : i32, i32
  }
  func.func @transform_11(%arg0: i32) -> (i32, i32, i32) {
    %c0_i32 = arith.constant 0 : i32
    %c0_i32_0 = arith.constant 0 : i32
    %c0_i32_1 = arith.constant 0 : i32
    return %arg0, %c0_i32, %c0_i32_0 : i32, i32, i32
  }
}

</mosaic_0001>

<llo_original>
// kernel: tpu_custom_call.1
$region0: #{tpu_custom_call.1}
  #allocation0 [shape = 'u32[]', space=smem, size = 0x4, offset = 0x4, fixed_abs, tag = 'smem constant byte address 0x4 - core index']
  #allocation1 [shape = 'u32[144,128]{1,0:T(1,128)}', space=vmem, size = 0x12000, scoped, tag = 'internal scratch']
  %s0 = inlined_call_operand.vmem [shape: f32[2,8,32], index: 0, kind: input, shape index: {}]
  %s1 = inlined_call_operand.vmem [shape: f32[2,8,32], index: 1, kind: input, shape index: {}]
  %s2 = inlined_call_operand.vmem [shape: f32[2,8,32], index: 2, kind: input, shape index: {}]
  %s3 = inlined_call_operand.vmem [shape: f32[4,32,16], index: 3, kind: input, shape index: {}]
  %s4 = inlined_call_operand.vmem [shape: f32[4,1,16], index: 4, kind: input, shape index: {}]
  %s5 = inlined_call_operand.vmem [shape: f32[4,32,16], index: 5, kind: input, shape index: {}]
  %s6 = inlined_call_operand.vmem [shape: f32[4,1,16], index: 6, kind: input, shape index: {}]
  %s7 = inlined_call_operand.vmem [shape: f32[4,32,16], index: 7, kind: input, shape index: {}]
  %s8 = inlined_call_operand.vmem [shape: f32[4,1,16], index: 8, kind: input, shape index: {}]
  %s9 = inlined_call_operand.vmem [shape: f32[4,16,128], index: 9, kind: input, shape index: {}]
  %s10 = inlined_call_operand.vmem [shape: f32[1,128], index: 10, kind: input, shape index: {}]
  %s11 = inlined_call_operand.hbm [shape: f32[2,8,128], index: 11, kind: output, shape index: {}]
  %s12 = sld [smem:[#allocation0]]
  $region77: #{tpu_custom_call.1} parent=0
    _
  %s14 = ssub.s32 1, %s12
  %s15 = scalar_select 0, %s14, %s12
  $region1: #{tpu_custom_call.1} parent=0
    #allocation2 [shape = 'u8[8192]{0}', space=vmem, size = 0x2000, scoped, tag = 'output window, operand 0']
    #allocation3 [shape = 's32[2]{0}', space=sflag, size = 0x8, scoped, tag = 'scoped memory for tpu_custom_call.1']
    %16 = vsyncpa [#allocation3], 0
    %s17 = scalar_lea.sflag [#allocation3], 1
    %18 = vsyncpa %s17, 0
    loop: start=0, step=1, limit=4
    $region2: #{tpu_custom_call.1} parent=1 // loop_pre_header
      _
    $region3: #{tpu_custom_call.1} parent=1 // loop_header
      %s20 = sphi 0, %s24
      %p21 = scmp.ge.s32.totalorder %s20, 4
      %s30 = sphi 0, %s32
      %s33 = sphi 0, %s30
      %s34 = sphi 0, %s33
      %s50 = sphi 0, %s34
      %s56 = sphi 0, %s58
      %s59 = sphi 0, %s56
      %s60 = sphi 0, %s59
      %s76 = sphi 0, %s60
      %s82 = sphi 0, %s84
      %s85 = sphi 0, %s82
      %s86 = sphi 0, %s85
      %s102 = sphi 0, %s86
      %s106 = sphi 0, %s106
      %s108 = sphi 0, %s106
      %s109 = sphi 0, %s108
      %s123 = sphi 0, %s109
      %s127 = sphi 0, %s127
      %s129 = sphi 0, %s127
      %s130 = sphi 0, %s129
      %s144 = sphi 0, %s130
      %s148 = sphi 0, %s148
      %s150 = sphi 0, %s148
      %s151 = sphi 0, %s150
      %s165 = sphi 0, %s151
      %s169 = sphi 0, %s169
      %s171 = sphi 0, %s169
      %s172 = sphi 0, %s171
      %s186 = sphi 0, %s172
      %s190 = sphi 0, %s190
      %s192 = sphi 0, %s190
      %s193 = sphi 0, %s192
      %s207 = sphi 0, %s193
      %s211 = sphi 0, %s211
      %s213 = sphi 0, %s211
      %s214 = sphi 0, %s213
      %s228 = sphi 0, %s214
      %s232 = sphi 0, %s232
      %s234 = sphi 0, %s232
      %s235 = sphi 0, %s234
      %s249 = sphi 0, %s235
      %s253 = sphi 0, %s253
      %s255 = sphi 0, %s253
      %s256 = sphi 0, %s255
      %s270 = sphi 0, %s256
      %s276 = sphi 0, %s278
      %s279 = sphi 0, %s276
      %s280 = sphi 0, %s279
      %s296 = sphi 0, %s280
    $region4: #{tpu_custom_call.1} parent=1 // loop_header_branch
      %23 = sbr.rel (%p21) target = $region8
    $region5: #{tpu_custom_call.1} parent=1 // loop_body
      %s25 = ssub.s32 %s20, 1
      %s26 = ssub.s32 %s20, 2
      %s27 = sadd.s32 %s20, 1
      %s28 = ssub.s32 %s20, %s27
      %p29 = scmp.eq.s32.totalorder %s28, 0
      %s31 = sadd.s32 %s30, 1
      %s32 = scalar_select %p29, %s30, %s31
      %p35 = pneg %p29
      %p36 = scmp.eq.s32.totalorder %s20, 1
      %p37 = por %p35, %p36
      %p38 = scmp.ne.s32.totalorder %s30, %s33
      %p39 = scmp.eq.s32.totalorder %s20, 0
      %p40 = por %p38, %p39
      %p41 = scmp.ne.s32.totalorder %s30, %s33
      %p42 = scmp.eq.s32.totalorder %s25, 1
      %p43 = por %p41, %p42
      %p44 = scmp.ne.s32.totalorder %s33, %s34
      %p45 = scmp.eq.s32.totalorder %s25, 0
      %p46 = por %p44, %p45
      %p47 = scmp.ne.s32.totalorder %s33, %s34
      %p48 = scmp.eq.s32.totalorder %s26, 1
      %p49 = por %p47, %p48
      %p51 = scmp.ne.s32.totalorder %s34, %s50
      %p52 = scmp.eq.s32.totalorder %s26, 0
      %p53 = por %p51, %p52
      %s54 = ssub.s32 %s20, %s27
      %p55 = scmp.eq.s32.totalorder %s54, 0
      %s57 = sadd.s32 %s56, 1
      %s58 = scalar_select %p55, %s56, %s57
      %p61 = pneg %p55
      %p62 = scmp.eq.s32.totalorder %s20, 1
      %p63 = por %p61, %p62
      %p64 = scmp.ne.s32.totalorder %s56, %s59
      %p65 = scmp.eq.s32.totalorder %s20, 0
      %p66 = por %p64, %p65
      %p67 = scmp.ne.s32.totalorder %s56, %s59
      %p68 = scmp.eq.s32.totalorder %s25, 1
      %p69 = por %p67, %p68
      %p70 = scmp.ne.s32.totalorder %s59, %s60
      %p71 = scmp.eq.s32.totalorder %s25, 0
      %p72 = por %p70, %p71
      %p73 = scmp.ne.s32.totalorder %s59, %s60
      %p74 = scmp.eq.s32.totalorder %s26, 1
      %p75 = por %p73, %p74
      %p77 = scmp.ne.s32.totalorder %s60, %s76
      %p78 = scmp.eq.s32.totalorder %s26, 0
      %p79 = por %p77, %p78
      %s80 = ssub.s32 %s20, %s27
      %p81 = scmp.eq.s32.totalorder %s80, 0
      %s83 = sadd.s32 %s82, 1
      %s84 = scalar_select %p81, %s82, %s83
      %p87 = pneg %p81
      %p88 = scmp.eq.s32.totalorder %s20, 1
      %p89 = por %p87, %p88
      %p90 = scmp.ne.s32.totalorder %s82, %s85
      %p91 = scmp.eq.s32.totalorder %s20, 0
      %p92 = por %p90, %p91
      %p93 = scmp.ne.s32.totalorder %s82, %s85
      %p94 = scmp.eq.s32.totalorder %s25, 1
      %p95 = por %p93, %p94
      %p96 = scmp.ne.s32.totalorder %s85, %s86
      %p97 = scmp.eq.s32.totalorder %s25, 0
      %p98 = por %p96, %p97
      %p99 = scmp.ne.s32.totalorder %s85, %s86
      %p100 = scmp.eq.s32.totalorder %s26, 1
      %p101 = por %p99, %p100
      %p103 = scmp.ne.s32.totalorder %s86, %s102
      %p104 = scmp.eq.s32.totalorder %s26, 0
      %p105 = por %p103, %p104
      %s107 = sadd.s32 %s106, 1
      %p110 = scmp.eq.s32.totalorder %s20, 1
      %p111 = scmp.ne.s32.totalorder %s106, %s108
      %p112 = scmp.eq.s32.totalorder %s20, 0
      %p113 = por %p111, %p112
      %p114 = scmp.ne.s32.totalorder %s106, %s108
      %p115 = scmp.eq.s32.totalorder %s25, 1
      %p116 = por %p114, %p115
      %p117 = scmp.ne.s32.totalorder %s108, %s109
      %p118 = scmp.eq.s32.totalorder %s25, 0
      %p119 = por %p117, %p118
      %p120 = scmp.ne.s32.totalorder %s108, %s109
      %p121 = scmp.eq.s32.totalorder %s26, 1
      %p122 = por %p120, %p121
      %p124 = scmp.ne.s32.totalorder %s109, %s123
      %p125 = scmp.eq.s32.totalorder %s26, 0
      %p126 = por %p124, %p125
      %s128 = sadd.s32 %s127, 1
      %p131 = scmp.eq.s32.totalorder %s20, 1
      %p132 = scmp.ne.s32.totalorder %s127, %s129
      %p133 = scmp.eq.s32.totalorder %s20, 0
      %p134 = por %p132, %p133
      %p135 = scmp.ne.s32.totalorder %s127, %s129
      %p136 = scmp.eq.s32.totalorder %s25, 1
      %p137 = por %p135, %p136
      %p138 = scmp.ne.s32.totalorder %s129, %s130
      %p139 = scmp.eq.s32.totalorder %s25, 0
      %p140 = por %p138, %p139
      %p141 = scmp.ne.s32.totalorder %s129, %s130
      %p142 = scmp.eq.s32.totalorder %s26, 1
      %p143 = por %p141, %p142
      %p145 = scmp.ne.s32.totalorder %s130, %s144
      %p146 = scmp.eq.s32.totalorder %s26, 0
      %p147 = por %p145, %p146
      %s149 = sadd.s32 %s148, 1
      %p152 = scmp.eq.s32.totalorder %s20, 1
      %p153 = scmp.ne.s32.totalorder %s148, %s150
      %p154 = scmp.eq.s32.totalorder %s20, 0
      %p155 = por %p153, %p154
      %p156 = scmp.ne.s32.totalorder %s148, %s150
      %p157 = scmp.eq.s32.totalorder %s25, 1
      %p158 = por %p156, %p157
      %p159 = scmp.ne.s32.totalorder %s150, %s151
      %p160 = scmp.eq.s32.totalorder %s25, 0
      %p161 = por %p159, %p160
      %p162 = scmp.ne.s32.totalorder %s150, %s151
      %p163 = scmp.eq.s32.totalorder %s26, 1
      %p164 = por %p162, %p163
      %p166 = scmp.ne.s32.totalorder %s151, %s165
      %p167 = scmp.eq.s32.totalorder %s26, 0
      %p168 = por %p166, %p167
      %s170 = sadd.s32 %s169, 1
      %p173 = scmp.eq.s32.totalorder %s20, 1
      %p174 = scmp.ne.s32.totalorder %s169, %s171
      %p175 = scmp.eq.s32.totalorder %s20, 0
      %p176 = por %p174, %p175
      %p177 = scmp.ne.s32.totalorder %s169, %s171
      %p178 = scmp.eq.s32.totalorder %s25, 1
      %p179 = por %p177, %p178
      %p180 = scmp.ne.s32.totalorder %s171, %s172
      %p181 = scmp.eq.s32.totalorder %s25, 0
      %p182 = por %p180, %p181
      %p183 = scmp.ne.s32.totalorder %s171, %s172
      %p184 = scmp.eq.s32.totalorder %s26, 1
      %p185 = por %p183, %p184
      %p187 = scmp.ne.s32.totalorder %s172, %s186
      %p188 = scmp.eq.s32.totalorder %s26, 0
      %p189 = por %p187, %p188
      %s191 = sadd.s32 %s190, 1
      %p194 = scmp.eq.s32.totalorder %s20, 1
      %p195 = scmp.ne.s32.totalorder %s190, %s192
      %p196 = scmp.eq.s32.totalorder %s20, 0
      %p197 = por %p195, %p196
      %p198 = scmp.ne.s32.totalorder %s190, %s192
      %p199 = scmp.eq.s32.totalorder %s25, 1
      %p200 = por %p198, %p199
      %p201 = scmp.ne.s32.totalorder %s192, %s193
      %p202 = scmp.eq.s32.totalorder %s25, 0
      %p203 = por %p201, %p202
      %p204 = scmp.ne.s32.totalorder %s192, %s193
      %p205 = scmp.eq.s32.totalorder %s26, 1
      %p206 = por %p204, %p205
      %p208 = scmp.ne.s32.totalorder %s193, %s207
      %p209 = scmp.eq.s32.totalorder %s26, 0
      %p210 = por %p208, %p209
      %s212 = sadd.s32 %s211, 1
      %p215 = scmp.eq.s32.totalorder %s20, 1
      %p216 = scmp.ne.s32.totalorder %s211, %s213
      %p217 = scmp.eq.s32.totalorder %s20, 0
      %p218 = por %p216, %p217
      %p219 = scmp.ne.s32.totalorder %s211, %s213
      %p220 = scmp.eq.s32.totalorder %s25, 1
      %p221 = por %p219, %p220
      %p222 = scmp.ne.s32.totalorder %s213, %s214
      %p223 = scmp.eq.s32.totalorder %s25, 0
      %p224 = por %p222, %p223
      %p225 = scmp.ne.s32.totalorder %s213, %s214
      %p226 = scmp.eq.s32.totalorder %s26, 1
      %p227 = por %p225, %p226
      %p229 = scmp.ne.s32.totalorder %s214, %s228
      %p230 = scmp.eq.s32.totalorder %s26, 0
      %p231 = por %p229, %p230
      %s233 = sadd.s32 %s232, 1
      %p236 = scmp.eq.s32.totalorder %s20, 1
      %p237 = scmp.ne.s32.totalorder %s232, %s234
      %p238 = scmp.eq.s32.totalorder %s20, 0
      %p239 = por %p237, %p238
      %p240 = scmp.ne.s32.totalorder %s232, %s234
      %p241 = scmp.eq.s32.totalorder %s25, 1
      %p242 = por %p240, %p241
      %p243 = scmp.ne.s32.totalorder %s234, %s235
      %p244 = scmp.eq.s32.totalorder %s25, 0
      %p245 = por %p243, %p244
      %p246 = scmp.ne.s32.totalorder %s234, %s235
      %p247 = scmp.eq.s32.totalorder %s26, 1
      %p248 = por %p246, %p247
      %p250 = scmp.ne.s32.totalorder %s235, %s249
      %p251 = scmp.eq.s32.totalorder %s26, 0
      %p252 = por %p250, %p251
      %s254 = sadd.s32 %s253, 1
      %p257 = scmp.eq.s32.totalorder %s20, 1
      %p258 = scmp.ne.s32.totalorder %s253, %s255
      %p259 = scmp.eq.s32.totalorder %s20, 0
      %p260 = por %p258, %p259
      %p261 = scmp.ne.s32.totalorder %s253, %s255
      %p262 = scmp.eq.s32.totalorder %s25, 1
      %p263 = por %p261, %p262
      %p264 = scmp.ne.s32.totalorder %s255, %s256
      %p265 = scmp.eq.s32.totalorder %s25, 0
      %p266 = por %p264, %p265
      %p267 = scmp.ne.s32.totalorder %s255, %s256
      %p268 = scmp.eq.s32.totalorder %s26, 1
      %p269 = por %p267, %p268
      %p271 = scmp.ne.s32.totalorder %s256, %s270
      %p272 = scmp.eq.s32.totalorder %s26, 0
      %p273 = por %p271, %p272
      %s274 = ssub.s32 %s20, %s27
      %p275 = scmp.eq.s32.totalorder %s274, 0
      %s277 = sadd.s32 %s276, 1
      %s278 = scalar_select %p275, %s276, %s277
      %p281 = pneg %p275
      %p282 = scmp.eq.s32.totalorder %s20, 1
      %p283 = por %p281, %p282
      %p284 = scmp.ne.s32.totalorder %s276, %s279
      %p285 = scmp.eq.s32.totalorder %s20, 0
      %p286 = por %p284, %p285
      %p287 = scmp.ne.s32.totalorder %s276, %s279
      %p288 = scmp.eq.s32.totalorder %s25, 1
      %p289 = por %p287, %p288
      %p290 = scmp.ne.s32.totalorder %s279, %s280
      %p291 = scmp.eq.s32.totalorder %s25, 0
      %p292 = por %p290, %p291
      %p293 = scmp.ne.s32.totalorder %s279, %s280
      %p294 = scmp.eq.s32.totalorder %s26, 1
      %p295 = por %p293, %p294
      %p297 = scmp.ne.s32.totalorder %s280, %s296
      %p298 = scmp.eq.s32.totalorder %s26, 0
      %p299 = por %p297, %p298
      %p300 = scmp.le.s32.totalorder 1, %s20
      %p301 = scmp.lt.s32.totalorder %s20, 3
      %p302 = pnand %p300, %p301
      %p303 = pneg %p302
      // Predicated region
      $region9: #{tpu_custom_call.1} parent=5 // pred_check
        _
      $region10: #{tpu_custom_call.1} parent=5 // pred_check_branch
        %305 = sbr.rel (%p302) target = $region12
      $region11: #{tpu_custom_call.1} parent=5 // pred_region
        %s306 = ssub.s32 %s20, 1
        // Predicated region
        $region13: #{tpu_custom_call.1} parent=11 // pred_check
          %p307 = pneg %p119
        $region14: #{tpu_custom_call.1} parent=11 // pred_check_branch
          %309 = sbr.rel (%p307) target = $region16
        $region15: #{tpu_custom_call.1} parent=11 // pred_region
          _
        $region16: #{tpu_custom_call.1} parent=11 // pred_fallthru
          _
        // Predicated region
        $region17: #{tpu_custom_call.1} parent=11 // pred_check
          %p310 = pneg %p140
        $region18: #{tpu_custom_call.1} parent=11 // pred_check_branch
          %312 = sbr.rel (%p310) target = $region20
        $region19: #{tpu_custom_call.1} parent=11 // pred_region
          _
        $region20: #{tpu_custom_call.1} parent=11 // pred_fallthru
          _
        // Predicated region
        $region21: #{tpu_custom_call.1} parent=11 // pred_check
          %p313 = pneg %p161
        $region22: #{tpu_custom_call.1} parent=11 // pred_check_branch
          %315 = sbr.rel (%p313) target = $region24
        $region23: #{tpu_custom_call.1} parent=11 // pred_region
          _
        $region24: #{tpu_custom_call.1} parent=11 // pred_fallthru
          _
        // Predicated region
        $region25: #{tpu_custom_call.1} parent=11 // pred_check
          %p316 = pneg %p182
        $region26: #{tpu_custom_call.1} parent=11 // pred_check_branch
          %318 = sbr.rel (%p316) target = $region28
        $region27: #{tpu_custom_call.1} parent=11 // pred_region
          _
        $region28: #{tpu_custom_call.1} parent=11 // pred_fallthru
          _
        // Predicated region
        $region29: #{tpu_custom_call.1} parent=11 // pred_check
          %p319 = pneg %p203
        $region30: #{tpu_custom_call.1} parent=11 // pred_check_branch
          %321 = sbr.rel (%p319) target = $region32
        $region31: #{tpu_custom_call.1} parent=11 // pred_region
          _
        $region32: #{tpu_custom_call.1} parent=11 // pred_fallthru
          _
        // Predicated region
        $region33: #{tpu_custom_call.1} parent=11 // pred_check
          %p322 = pneg %p224
        $region34: #{tpu_custom_call.1} parent=11 // pred_check_branch
          %324 = sbr.rel (%p322) target = $region36
        $region35: #{tpu_custom_call.1} parent=11 // pred_region
          _
        $region36: #{tpu_custom_call.1} parent=11 // pred_fallthru
          _
        // Predicated region
        $region37: #{tpu_custom_call.1} parent=11 // pred_check
          %p325 = pneg %p245
        $region38: #{tpu_custom_call.1} parent=11 // pred_check_branch
          %327 = sbr.rel (%p325) target = $region40
        $region39: #{tpu_custom_call.1} parent=11 // pred_region
          _
        $region40: #{tpu_custom_call.1} parent=11 // pred_fallthru
          _
        // Predicated region
        $region41: #{tpu_custom_call.1} parent=11 // pred_check
          %p328 = pneg %p266
        $region42: #{tpu_custom_call.1} parent=11 // pred_check_branch
          %330 = sbr.rel (%p328) target = $region44
        $region43: #{tpu_custom_call.1} parent=11 // pred_region
          _
        $region44: #{tpu_custom_call.1} parent=11 // pred_fallthru
          _
      $region12: #{tpu_custom_call.1} parent=5 // pred_fallthru
        _
      %p331 = scmp.lt.s32.totalorder %s20, 2
      // Predicated region
      $region45: #{tpu_custom_call.1} parent=5 // pred_check
        %p332 = pneg %p331
      $region46: #{tpu_custom_call.1} parent=5 // pred_check_branch
        %334 = sbr.rel (%p332) target = $region48
      $region47: #{tpu_custom_call.1} parent=5 // pred_region
        // Predicated region
        $region49: #{tpu_custom_call.1} parent=47 // pred_check
          %p335 = pneg %p40
        $region50: #{tpu_custom_call.1} parent=47 // pred_check_branch
          %337 = sbr.rel (%p335) target = $region52
        $region51: #{tpu_custom_call.1} parent=47 // pred_region
          %p338 = scmp.lt.s32.totalorder %s20, 1
          %s339 = scalar_select %p338, %s20, 1
          %s340 = smul.addr %s339, 8
          %s341 = scalar_lea.vmem %s0, %s340
        $region52: #{tpu_custom_call.1} parent=47 // pred_fallthru
          _
        // Predicated region
        $region53: #{tpu_custom_call.1} parent=47 // pred_check
          %p342 = pneg %p66
        $region54: #{tpu_custom_call.1} parent=47 // pred_check_branch
          %344 = sbr.rel (%p342) target = $region56
        $region55: #{tpu_custom_call.1} parent=47 // pred_region
          %p345 = scmp.lt.s32.totalorder %s20, 1
          %s346 = scalar_select %p345, %s20, 1
          %s347 = smul.addr %s346, 8
          %s348 = scalar_lea.vmem %s1, %s347
        $region56: #{tpu_custom_call.1} parent=47 // pred_fallthru
          _
        // Predicated region
        $region57: #{tpu_custom_call.1} parent=47 // pred_check
          %p349 = pneg %p92
        $region58: #{tpu_custom_call.1} parent=47 // pred_check_branch
          %351 = sbr.rel (%p349) target = $region60
        $region59: #{tpu_custom_call.1} parent=47 // pred_region
          %p352 = scmp.lt.s32.totalorder %s20, 1
          %s353 = scalar_select %p352, %s20, 1
          %s354 = smul.addr %s353, 8
          %s355 = scalar_lea.vmem %s2, %s354
        $region60: #{tpu_custom_call.1} parent=47 // pred_fallthru
          _
      $region48: #{tpu_custom_call.1} parent=5 // pred_fallthru
        _
      %p356 = scmp.le.s32.totalorder 1, %s20
      %p357 = scmp.lt.s32.totalorder %s20, 3
      %p358 = pnand %p356, %p357
      %p359 = pneg %p358
      // Predicated region
      $region61: #{tpu_custom_call.1} parent=5 // pred_check
        _
      $region62: #{tpu_custom_call.1} parent=5 // pred_check_branch
        %361 = sbr.rel (%p358) target = $region64
      $region63: #{tpu_custom_call.1} parent=5 // pred_region
        %s362 = ssub.s32 %s20, 1
        %p363 = scmp.lt.s32.totalorder %s25, 1
        %s364 = scalar_select %p363, %s25, 1
        %s365 = smul.addr %s364, 8
        %s366 = scalar_lea.vmem %s0, %s365
        %p367 = pneg %p46
        %p368 = pneg %p43
        %p369 = scmp.lt.s32.totalorder %s25, 1
        %s370 = scalar_select %p369, %s25, 1
        %s371 = smul.addr %s370, 8
        %s372 = scalar_lea.vmem %s1, %s371
        %p373 = pneg %p72
        %p374 = pneg %p69
        %p375 = scmp.lt.s32.totalorder %s25, 1
        %s376 = scalar_select %p375, %s25, 1
        %s377 = smul.addr %s376, 8
        %s378 = scalar_lea.vmem %s2, %s377
        %p379 = pneg %p98
        %p380 = pneg %p95
        %p381 = pneg %p119
        %p382 = pneg %p116
        %p383 = pneg %p140
        %p384 = pneg %p137
        %p385 = pneg %p161
        %p386 = pneg %p158
        %p387 = pneg %p182
        %p388 = pneg %p179
        %p389 = pneg %p203
        %p390 = pneg %p200
        %p391 = pneg %p224
        %p392 = pneg %p221
        %p393 = pneg %p245
        %p394 = pneg %p242
        %p395 = pneg %p266
        %p396 = pneg %p263
        %p397 = pneg %p292
        %p398 = pneg %p289
        %s399 = sand.u32 %s279, 1
        %s400 = scalar_lea.sflag [#allocation3], %s399
        %s401 = sand.u32 %s279, 1
        %s402 = smul.addr %s401, 8
        %s403 = scalar_lea.vmem [#allocation2], %s402
        %p404 = scmp.lt.s32.totalorder %s25, 1
        %s405 = scalar_select %p404, %s25, 1
        %s406 = smul.addr %s405, 8
        %s407 = scalar_lea.vmem %s0, %s406
        %p408 = scmp.lt.s32.totalorder %s25, 1
        %s409 = scalar_select %p408, %s25, 1
        %s410 = smul.addr %s409, 8
        %s411 = scalar_lea.vmem %s1, %s410
        %p412 = scmp.lt.s32.totalorder %s25, 1
        %s413 = scalar_select %p412, %s25, 1
        %s414 = smul.addr %s413, 8
        %s415 = scalar_lea.vmem %s2, %s414
        %v416 = vld [vmem:[%s407] sm:$0xff]
        %v417 = vld [vmem:[%s411] sm:$0xff]
        %v418 = vld [vmem:[%s415] sm:$0xff]
        %v419 = vld [vmem:[%s3] sm:$0xff]
        %v420 = vld [vmem:[%s3 + $0x8] sm:$0xff]
        %v421 = vld [vmem:[%s3 + $0x10] sm:$0xff]
        %v422 = vld [vmem:[%s3 + $0x18] sm:$0xff]
        %v423 = vld [vmem:[%s4] sm:$0x1]
        %v425 = vlaneseq
        %v426 = vshrl.u32 %v425, 7
        %v427 = vsub.s32 0, %v426
        %v428 = vrot.slane %v423, %v427
        %vm430 = vcmask 261120
        %v432 = vsel %vm430, %v416, 0
        %434 = vmatprep.subr.mxu0 0.0
        %435 = vmatpush1.msra.mxu0 %v419
        %436 = vmatprep.subr.mxu0 0.0
        %437 = vmatpush1.msra.mxu0 %v420
        %438 = vmatprep.subr.mxu0 0.0
        %439 = vmatpush1.msra.mxu0 %v421
        %440 = vmatprep.subr.mxu0 0.0
        %441 = vmatpush1.msra.mxu0 %v422
        %442 = vmatprep.subr.mxu0 0.0
        %443 = vmatpush1.msra.mxu0 0.0
        %444 = vmatprep.subr.mxu0 0.0
        %445 = vmatpush1.msra.mxu0 0.0
        %446 = vmatprep.subr.mxu0 0.0
        %447 = vmatpush1.msra.mxu0 0.0
        %448 = vmatprep.subr.mxu0 0.0
        %449 = vmatpush1.msra.mxu0 0.0
        %450 = vmatprep.subr.mxu0 0.0
        %451 = vmatpush1.msra.mxu0 0.0
        %452 = vmatprep.subr.mxu0 0.0
        %453 = vmatpush1.msra.mxu0 0.0
        %454 = vmatprep.subr.mxu0 0.0
        %455 = vmatpush1.msra.mxu0 0.0
        %456 = vmatprep.subr.mxu0 0.0
        %457 = vmatpush1.msra.mxu0 0.0
        %458 = vmatprep.subr.mxu0 0.0
        %459 = vmatpush1.msra.mxu0 0.0
        %460 = vmatprep.subr.mxu0 0.0
        %461 = vmatpush1.msra.mxu0 0.0
        %462 = vmatprep.subr.mxu0 0.0
        %463 = vmatpush1.msra.mxu0 0.0
        %464 = vmatprep.subr.mxu0 0.0
        %465 = vmatpush1.msra.mxu0 0.0
        %466 = vmatprep.subr.mxu0 0.0
        %467 = vmatpush1.msra.mxu0 0.0
        %468 = vmatprep.subr.mxu0 0.0
        %469 = vmatpush1.msra.mxu0 0.0
        %470 = vmatprep.subr.mxu0 0.0
        %471 = vmatpush1.msra.mxu0 0.0
        %472 = vmatprep.subr.mxu0 0.0
        %473 = vmatpush1.msra.mxu0 0.0
        %474 = vmatprep.subr.mxu0 0.0
        %475 = vmatpush1.msra.mxu0 0.0
        %476 = vmatprep.subr.mxu0 0.0
        %477 = vmatpush1.msra.mxu0 0.0
        %478 = vmatprep.subr.mxu0 0.0
        %479 = vmatpush1.msra.mxu0 0.0
        %480 = vmatprep.subr.mxu0 0.0
        %481 = vmatpush1.msra.mxu0 0.0
        %482 = vmatprep.subr.mxu0 0.0
        %483 = vmatpush1.msra.mxu0 0.0
        %484 = vmatprep.subr.mxu0 0.0
        %485 = vmatpush1.msra.mxu0 0.0
        %486 = vmatprep.subr.mxu0 0.0
        %487 = vmatpush1.msra.mxu0 0.0
        %488 = vmatprep.subr.mxu0 0.0
        %489 = vmatpush1.msra.mxu0 0.0
        %490 = vmatprep.subr.mxu0 0.0
        %491 = vmatpush1.msra.mxu0 0.0
        %492 = vmatprep.subr.mxu0 0.0
        %493 = vmatpush1.msra.mxu0 0.0
        %494 = vmatprep.subr.mxu0 0.0
        %495 = vmatpush1.msra.mxu0 0.0
        %496 = vmatprep.subr.mxu0 0.0
        %497 = vmatpush1.msra.mxu0 0.0
        %498 = vmatprep.mubr.f32.mxu0 0.0
        %499 = vmatmul.mubr.f32.gmra.mrb[0].mxu0 %v432
        %v500 = vpop.f32.mrb[0].mxu0
        %v501 = vadd.f32 %v428, %v500
        %v502 = vpop.f32.mrb[0].mxu0
        %503 = vdwg.mxu0
        %v504 = vld [vmem:[%s5] sm:$0xff]
        %v505 = vld [vmem:[%s5 + $0x8] sm:$0xff]
        %v506 = vld [vmem:[%s5 + $0x10] sm:$0xff]
        %v507 = vld [vmem:[%s5 + $0x18] sm:$0xff]
        %v508 = vld [vmem:[%s6] sm:$0x1]
        %v510 = vlaneseq
        %v511 = vshrl.u32 %v510, 7
        %v512 = vsub.s32 0, %v511
        %v513 = vrot.slane %v508, %v512
        %v516 = vsel %vm430, %v417, 0
        %518 = vmatprep.subr.mxu0 0.0
        %519 = vmatpush1.msra.mxu0 %v504
        %520 = vmatprep.subr.mxu0 0.0
        %521 = vmatpush1.msra.mxu0 %v505
        %522 = vmatprep.subr.mxu0 0.0
        %523 = vmatpush1.msra.mxu0 %v506
        %524 = vmatprep.subr.mxu0 0.0
        %525 = vmatpush1.msra.mxu0 %v507
        %526 = vmatprep.subr.mxu0 0.0
        %527 = vmatpush1.msra.mxu0 0.0
        %528 = vmatprep.subr.mxu0 0.0
        %529 = vmatpush1.msra.mxu0 0.0
        %530 = vmatprep.subr.mxu0 0.0
        %531 = vmatpush1.msra.mxu0 0.0
        %532 = vmatprep.subr.mxu0 0.0
        %533 = vmatpush1.msra.mxu0 0.0
        %534 = vmatprep.subr.mxu0 0.0
        %535 = vmatpush1.msra.mxu0 0.0
        %536 = vmatprep.subr.mxu0 0.0
        %537 = vmatpush1.msra.mxu0 0.0
        %538 = vmatprep.subr.mxu0 0.0
        %539 = vmatpush1.msra.mxu0 0.0
        %540 = vmatprep.subr.mxu0 0.0
        %541 = vmatpush1.msra.mxu0 0.0
        %542 = vmatprep.subr.mxu0 0.0
        %543 = vmatpush1.msra.mxu0 0.0
        %544 = vmatprep.subr.mxu0 0.0
        %545 = vmatpush1.msra.mxu0 0.0
        %546 = vmatprep.subr.mxu0 0.0
        %547 = vmatpush1.msra.mxu0 0.0
        %548 = vmatprep.subr.mxu0 0.0
        %549 = vmatpush1.msra.mxu0 0.0
        %550 = vmatprep.subr.mxu0 0.0
        %551 = vmatpush1.msra.mxu0 0.0
        %552 = vmatprep.subr.mxu0 0.0
        %553 = vmatpush1.msra.mxu0 0.0
        %554 = vmatprep.subr.mxu0 0.0
        %555 = vmatpush1.msra.mxu0 0.0
        %556 = vmatprep.subr.mxu0 0.0
        %557 = vmatpush1.msra.mxu0 0.0
        %558 = vmatprep.subr.mxu0 0.0
        %559 = vmatpush1.msra.mxu0 0.0
        %560 = vmatprep.subr.mxu0 0.0
        %561 = vmatpush1.msra.mxu0 0.0
        %562 = vmatprep.subr.mxu0 0.0
        %563 = vmatpush1.msra.mxu0 0.0
        %564 = vmatprep.subr.mxu0 0.0
        %565 = vmatpush1.msra.mxu0 0.0
        %566 = vmatprep.subr.mxu0 0.0
        %567 = vmatpush1.msra.mxu0 0.0
        %568 = vmatprep.subr.mxu0 0.0
        %569 = vmatpush1.msra.mxu0 0.0
        %570 = vmatprep.subr.mxu0 0.0
        %571 = vmatpush1.msra.mxu0 0.0
        %572 = vmatprep.subr.mxu0 0.0
        %573 = vmatpush1.msra.mxu0 0.0
        %574 = vmatprep.subr.mxu0 0.0
        %575 = vmatpush1.msra.mxu0 0.0
        %576 = vmatprep.subr.mxu0 0.0
        %577 = vmatpush1.msra.mxu0 0.0
        %578 = vmatprep.subr.mxu0 0.0
        %579 = vmatpush1.msra.mxu0 0.0
        %580 = vmatprep.subr.mxu0 0.0
        %581 = vmatpush1.msra.mxu0 0.0
        %582 = vmatprep.mubr.f32.mxu0 0.0
        %583 = vmatmul.mubr.f32.gmra.mrb[0].mxu0 %v516
        %v584 = vpop.f32.mrb[0].mxu0
        %v585 = vadd.f32 %v513, %v584
        %v586 = vpop.f32.mrb[0].mxu0
        %587 = vdwg.mxu0
        %v588 = vld [vmem:[%s7] sm:$0xff]
        %v589 = vld [vmem:[%s7 + $0x8] sm:$0xff]
        %v590 = vld [vmem:[%s7 + $0x10] sm:$0xff]
        %v591 = vld [vmem:[%s7 + $0x18] sm:$0xff]
        %v592 = vld [vmem:[%s8] sm:$0x1]
        %v594 = vlaneseq
        %v595 = vshrl.u32 %v594, 7
        %v596 = vsub.s32 0, %v595
        %v597 = vrot.slane %v592, %v596
        %v600 = vsel %vm430, %v418, 0
        %602 = vmatprep.subr.mxu0 0.0
        %603 = vmatpush1.msra.mxu0 %v588
        %604 = vmatprep.subr.mxu0 0.0
        %605 = vmatpush1.msra.mxu0 %v589
        %606 = vmatprep.subr.mxu0 0.0
        %607 = vmatpush1.msra.mxu0 %v590
        %608 = vmatprep.subr.mxu0 0.0
        %609 = vmatpush1.msra.mxu0 %v591
        %610 = vmatprep.subr.mxu0 0.0
        %611 = vmatpush1.msra.mxu0 0.0
        %612 = vmatprep.subr.mxu0 0.0
        %613 = vmatpush1.msra.mxu0 0.0
        %614 = vmatprep.subr.mxu0 0.0
        %615 = vmatpush1.msra.mxu0 0.0
        %616 = vmatprep.subr.mxu0 0.0
        %617 = vmatpush1.msra.mxu0 0.0
        %618 = vmatprep.subr.mxu0 0.0
        %619 = vmatpush1.msra.mxu0 0.0
        %620 = vmatprep.subr.mxu0 0.0
        %621 = vmatpush1.msra.mxu0 0.0
        %622 = vmatprep.subr.mxu0 0.0
        %623 = vmatpush1.msra.mxu0 0.0
        %624 = vmatprep.subr.mxu0 0.0
        %625 = vmatpush1.msra.mxu0 0.0
        %626 = vmatprep.subr.mxu0 0.0
        %627 = vmatpush1.msra.mxu0 0.0
        %628 = vmatprep.subr.mxu0 0.0
        %629 = vmatpush1.msra.mxu0 0.0
        %630 = vmatprep.subr.mxu0 0.0
        %631 = vmatpush1.msra.mxu0 0.0
        %632 = vmatprep.subr.mxu0 0.0
        %633 = vmatpush1.msra.mxu0 0.0
        %634 = vmatprep.subr.mxu0 0.0
        %635 = vmatpush1.msra.mxu0 0.0
        %636 = vmatprep.subr.mxu0 0.0
        %637 = vmatpush1.msra.mxu0 0.0
        %638 = vmatprep.subr.mxu0 0.0
        %639 = vmatpush1.msra.mxu0 0.0
        %640 = vmatprep.subr.mxu0 0.0
        %641 = vmatpush1.msra.mxu0 0.0
        %642 = vmatprep.subr.mxu0 0.0
        %643 = vmatpush1.msra.mxu0 0.0
        %644 = vmatprep.subr.mxu0 0.0
        %645 = vmatpush1.msra.mxu0 0.0
        %646 = vmatprep.subr.mxu0 0.0
        %647 = vmatpush1.msra.mxu0 0.0
        %648 = vmatprep.subr.mxu0 0.0
        %649 = vmatpush1.msra.mxu0 0.0
        %650 = vmatprep.subr.mxu0 0.0
        %651 = vmatpush1.msra.mxu0 0.0
        %652 = vmatprep.subr.mxu0 0.0
        %653 = vmatpush1.msra.mxu0 0.0
        %654 = vmatprep.subr.mxu0 0.0
        %655 = vmatpush1.msra.mxu0 0.0
        %656 = vmatprep.subr.mxu0 0.0
        %657 = vmatpush1.msra.mxu0 0.0
        %658 = vmatprep.subr.mxu0 0.0
        %659 = vmatpush1.msra.mxu0 0.0
        %660 = vmatprep.subr.mxu0 0.0
        %661 = vmatpush1.msra.mxu0 0.0
        %662 = vmatprep.subr.mxu0 0.0
        %663 = vmatpush1.msra.mxu0 0.0
        %664 = vmatprep.subr.mxu0 0.0
        %665 = vmatpush1.msra.mxu0 0.0
        %666 = vmatprep.mubr.f32.mxu0 0.0
        %667 = vmatmul.mubr.f32.gmra.mrb[0].mxu0 %v600
        %v668 = vpop.f32.mrb[0].mxu0
        %v669 = vadd.f32 %v597, %v668
        %v670 = vpop.f32.mrb[0].mxu0
        %671 = vdwg.mxu0
        %vm672 = vcmask 130048
        %v674 = vsel %vm672, %v501, 0
        %v677 = vsel %vm672, %v585, 0
        %679 = vmatprep.subr.mxu0 0.0
        %680 = vmatpush1.xpose.msra.mxu0 %v677
        %681 = vmatprep.subr.mxu0 0.0
        %682 = vmatpush1.xpose.msra.mxu0 0.0
        %683 = vmatprep.subr.mxu0 0.0
        %684 = vmatpush1.xpose.msra.mxu0 0.0
        %685 = vmatprep.subr.mxu0 0.0
        %686 = vmatpush1.xpose.msra.mxu0 0.0
        %687 = vmatprep.subr.mxu0 0.0
        %688 = vmatpush1.xpose.msra.mxu0 0.0
        %689 = vmatprep.subr.mxu0 0.0
        %690 = vmatpush1.xpose.msra.mxu0 0.0
        %691 = vmatprep.subr.mxu0 0.0
        %692 = vmatpush1.xpose.msra.mxu0 0.0
        %693 = vmatprep.subr.mxu0 0.0
        %694 = vmatpush1.xpose.msra.mxu0 0.0
        %695 = vmatprep.subr.mxu0 0.0
        %696 = vmatpush1.xpose.msra.mxu0 0.0
        %697 = vmatprep.subr.mxu0 0.0
        %698 = vmatpush1.xpose.msra.mxu0 0.0
        %699 = vmatprep.subr.mxu0 0.0
        %700 = vmatpush1.xpose.msra.mxu0 0.0
        %701 = vmatprep.subr.mxu0 0.0
        %702 = vmatpush1.xpose.msra.mxu0 0.0
        %703 = vmatprep.subr.mxu0 0.0
        %704 = vmatpush1.xpose.msra.mxu0 0.0
        %705 = vmatprep.subr.mxu0 0.0
        %706 = vmatpush1.xpose.msra.mxu0 0.0
        %707 = vmatprep.subr.mxu0 0.0
        %708 = vmatpush1.xpose.msra.mxu0 0.0
        %709 = vmatprep.subr.mxu0 0.0
        %710 = vmatpush1.xpose.msra.mxu0 0.0
        %711 = vmatprep.subr.mxu0 0.0
        %712 = vmatpush1.xpose.msra.mxu0 0.0
        %713 = vmatprep.subr.mxu0 0.0
        %714 = vmatpush1.xpose.msra.mxu0 0.0
        %715 = vmatprep.subr.mxu0 0.0
        %716 = vmatpush1.xpose.msra.mxu0 0.0
        %717 = vmatprep.subr.mxu0 0.0
        %718 = vmatpush1.xpose.msra.mxu0 0.0
        %719 = vmatprep.subr.mxu0 0.0
        %720 = vmatpush1.xpose.msra.mxu0 0.0
        %721 = vmatprep.subr.mxu0 0.0
        %722 = vmatpush1.xpose.msra.mxu0 0.0
        %723 = vmatprep.subr.mxu0 0.0
        %724 = vmatpush1.xpose.msra.mxu0 0.0
        %725 = vmatprep.subr.mxu0 0.0
        %726 = vmatpush1.xpose.msra.mxu0 0.0
        %727 = vmatprep.subr.mxu0 0.0
        %728 = vmatpush1.xpose.msra.mxu0 0.0
        %729 = vmatprep.subr.mxu0 0.0
        %730 = vmatpush1.xpose.msra.mxu0 0.0
        %731 = vmatprep.subr.mxu0 0.0
        %732 = vmatpush1.xpose.msra.mxu0 0.0
        %733 = vmatprep.subr.mxu0 0.0
        %734 = vmatpush1.xpose.msra.mxu0 0.0
        %735 = vmatprep.subr.mxu0 0.0
        %736 = vmatpush1.xpose.msra.mxu0 0.0
        %737 = vmatprep.subr.mxu0 0.0
        %738 = vmatpush1.xpose.msra.mxu0 0.0
        %739 = vmatprep.subr.mxu0 0.0
        %740 = vmatpush1.xpose.msra.mxu0 0.0
        %741 = vmatprep.subr.mxu0 0.0
        %742 = vmatpush1.xpose.msra.mxu0 0.0
        %743 = vmatprep.mubr.f32.mxu0 0.0
        %744 = vmatmul.mubr.f32.gmra.mrb[0].mxu0 %v674
        %v745 = vpop.f32.mrb[0].mxu0
        %v746 = vadd.f32 0.0, %v745
        %v747 = vpop.f32.mrb[0].mxu0
        %748 = vdwg.mxu0
        %vm749 = vcmask 64512
        %v750 = vsel %vm749, %v746, -inf
        %751 = vmax.xlane.f32.xlu0 %v750
        %v752 = vpop.xlane.xlu0 %751
        %v753 = vsub.f32 %v746, %v752
        %v754 = vmul.f32 %v753, 1.442695
        %v755 = vpow.pop %v754
        %v756 = vsel %vm749, %v755, 0.0
        %757 = vadd.xlane.f32.xlu0 %v756
        %v758 = vpop.xlane.xlu0 %757
        %v759 = vrcp.pop %v758
        %v760 = vmul.f32 %v755, %v759
        %v762 = vsel %vm749, %v760, 0
        %764 = vmatprep.subr.mxu0 0.0
        %765 = vmatpush1.msra.mxu0 %v669
        %766 = vmatprep.subr.mxu0 0.0
        %767 = vmatpush1.msra.mxu0 0.0
        %768 = vmatprep.subr.mxu0 0.0
        %769 = vmatpush1.msra.mxu0 0.0
        %770 = vmatprep.subr.mxu0 0.0
        %771 = vmatpush1.msra.mxu0 0.0
        %772 = vmatprep.subr.mxu0 0.0
        %773 = vmatpush1.msra.mxu0 0.0
        %774 = vmatprep.subr.mxu0 0.0
        %775 = vmatpush1.msra.mxu0 0.0
        %776 = vmatprep.subr.mxu0 0.0
        %777 = vmatpush1.msra.mxu0 0.0
        %778 = vmatprep.subr.mxu0 0.0
        %779 = vmatpush1.msra.mxu0 0.0
        %780 = vmatprep.subr.mxu0 0.0
        %781 = vmatpush1.msra.mxu0 0.0
        %782 = vmatprep.subr.mxu0 0.0
        %783 = vmatpush1.msra.mxu0 0.0
        %784 = vmatprep.subr.mxu0 0.0
        %785 = vmatpush1.msra.mxu0 0.0
        %786 = vmatprep.subr.mxu0 0.0
        %787 = vmatpush1.msra.mxu0 0.0
        %788 = vmatprep.subr.mxu0 0.0
        %789 = vmatpush1.msra.mxu0 0.0
        %790 = vmatprep.subr.mxu0 0.0
        %791 = vmatpush1.msra.mxu0 0.0
        %792 = vmatprep.subr.mxu0 0.0
        %793 = vmatpush1.msra.mxu0 0.0
        %794 = vmatprep.subr.mxu0 0.0
        %795 = vmatpush1.msra.mxu0 0.0
        %796 = vmatprep.subr.mxu0 0.0
        %797 = vmatpush1.msra.mxu0 0.0
        %798 = vmatprep.subr.mxu0 0.0
        %799 = vmatpush1.msra.mxu0 0.0
        %800 = vmatprep.subr.mxu0 0.0
        %801 = vmatpush1.msra.mxu0 0.0
        %802 = vmatprep.subr.mxu0 0.0
        %803 = vmatpush1.msra.mxu0 0.0
        %804 = vmatprep.subr.mxu0 0.0
        %805 = vmatpush1.msra.mxu0 0.0
        %806 = vmatprep.subr.mxu0 0.0
        %807 = vmatpush1.msra.mxu0 0.0
        %808 = vmatprep.subr.mxu0 0.0
        %809 = vmatpush1.msra.mxu0 0.0
        %810 = vmatprep.subr.mxu0 0.0
        %811 = vmatpush1.msra.mxu0 0.0
        %812 = vmatprep.subr.mxu0 0.0
        %813 = vmatpush1.msra.mxu0 0.0
        %814 = vmatprep.subr.mxu0 0.0
        %815 = vmatpush1.msra.mxu0 0.0
        %816 = vmatprep.subr.mxu0 0.0
        %817 = vmatpush1.msra.mxu0 0.0
        %818 = vmatprep.subr.mxu0 0.0
        %819 = vmatpush1.msra.mxu0 0.0
        %820 = vmatprep.subr.mxu0 0.0
        %821 = vmatpush1.msra.mxu0 0.0
        %822 = vmatprep.subr.mxu0 0.0
        %823 = vmatpush1.msra.mxu0 0.0
        %824 = vmatprep.subr.mxu0 0.0
        %825 = vmatpush1.msra.mxu0 0.0
        %826 = vmatprep.subr.mxu0 0.0
        %827 = vmatpush1.msra.mxu0 0.0
        %828 = vmatprep.mubr.f32.mxu0 0.0
        %829 = vmatmul.mubr.f32.gmra.mrb[0].mxu0 %v762
        %v830 = vpop.f32.mrb[0].mxu0
        %v831 = vadd.f32 0.0, %v830
        %v832 = vpop.f32.mrb[0].mxu0
        %833 = vdwg.mxu0
        %v834 = vld [vmem:[%s9] sm:$0xff]
        %v835 = vld [vmem:[%s9 + $0x8] sm:$0xff]
        %s836 = scalar_lea.vmem %s3, 32
        %v837 = vld [vmem:[%s836] sm:$0xff]
        %v838 = vld [vmem:[%s836 + $0x8] sm:$0xff]
        %v839 = vld [vmem:[%s836 + $0x10] sm:$0xff]
        %v840 = vld [vmem:[%s836 + $0x18] sm:$0xff]
        %s841 = scalar_lea.vmem %s4, 1
        %v842 = vld [vmem:[%s841] sm:$0x1]
        %v844 = vlaneseq
        %v845 = vshrl.u32 %v844, 7
        %v846 = vsub.s32 0, %v845
        %v847 = vrot.slane %v842, %v846
        %849 = vmatprep.subr.mxu0 0.0
        %850 = vmatpush1.msra.mxu0 %v837
        %851 = vmatprep.subr.mxu0 0.0
        %852 = vmatpush1.msra.mxu0 %v838
        %853 = vmatprep.subr.mxu0 0.0
        %854 = vmatpush1.msra.mxu0 %v839
        %855 = vmatprep.subr.mxu0 0.0
        %856 = vmatpush1.msra.mxu0 %v840
        %857 = vmatprep.subr.mxu0 0.0
        %858 = vmatpush1.msra.mxu0 0.0
        %859 = vmatprep.subr.mxu0 0.0
        %860 = vmatpush1.msra.mxu0 0.0
        %861 = vmatprep.subr.mxu0 0.0
        %862 = vmatpush1.msra.mxu0 0.0
        %863 = vmatprep.subr.mxu0 0.0
        %864 = vmatpush1.msra.mxu0 0.0
        %865 = vmatprep.subr.mxu0 0.0
        %866 = vmatpush1.msra.mxu0 0.0
        %867 = vmatprep.subr.mxu0 0.0
        %868 = vmatpush1.msra.mxu0 0.0
        %869 = vmatprep.subr.mxu0 0.0
        %870 = vmatpush1.msra.mxu0 0.0
        %871 = vmatprep.subr.mxu0 0.0
        %872 = vmatpush1.msra.mxu0 0.0
        %873 = vmatprep.subr.mxu0 0.0
        %874 = vmatpush1.msra.mxu0 0.0
        %875 = vmatprep.subr.mxu0 0.0
        %876 = vmatpush1.msra.mxu0 0.0
        %877 = vmatprep.subr.mxu0 0.0
        %878 = vmatpush1.msra.mxu0 0.0
        %879 = vmatprep.subr.mxu0 0.0
        %880 = vmatpush1.msra.mxu0 0.0
        %881 = vmatprep.subr.mxu0 0.0
        %882 = vmatpush1.msra.mxu0 0.0
        %883 = vmatprep.subr.mxu0 0.0
        %884 = vmatpush1.msra.mxu0 0.0
        %885 = vmatprep.subr.mxu0 0.0
        %886 = vmatpush1.msra.mxu0 0.0
        %887 = vmatprep.subr.mxu0 0.0
        %888 = vmatpush1.msra.mxu0 0.0
        %889 = vmatprep.subr.mxu0 0.0
        %890 = vmatpush1.msra.mxu0 0.0
        %891 = vmatprep.subr.mxu0 0.0
        %892 = vmatpush1.msra.mxu0 0.0
        %893 = vmatprep.subr.mxu0 0.0
        %894 = vmatpush1.msra.mxu0 0.0
        %895 = vmatprep.subr.mxu0 0.0
        %896 = vmatpush1.msra.mxu0 0.0
        %897 = vmatprep.subr.mxu0 0.0
        %898 = vmatpush1.msra.mxu0 0.0
        %899 = vmatprep.subr.mxu0 0.0
        %900 = vmatpush1.msra.mxu0 0.0
        %901 = vmatprep.subr.mxu0 0.0
        %902 = vmatpush1.msra.mxu0 0.0
        %903 = vmatprep.subr.mxu0 0.0
        %904 = vmatpush1.msra.mxu0 0.0
        %905 = vmatprep.subr.mxu0 0.0
        %906 = vmatpush1.msra.mxu0 0.0
        %907 = vmatprep.subr.mxu0 0.0
        %908 = vmatpush1.msra.mxu0 0.0
        %909 = vmatprep.subr.mxu0 0.0
        %910 = vmatpush1.msra.mxu0 0.0
        %911 = vmatprep.subr.mxu0 0.0
        %912 = vmatpush1.msra.mxu0 0.0
        %913 = vmatprep.mubr.f32.mxu0 0.0
        %914 = vmatmul.mubr.f32.gmra.mrb[0].mxu0 %v432
        %v915 = vpop.f32.mrb[0].mxu0
        %v916 = vadd.f32 %v847, %v915
        %v917 = vpop.f32.mrb[0].mxu0
        %918 = vdwg.mxu0
        %s919 = scalar_lea.vmem %s5, 32
        %v920 = vld [vmem:[%s919] sm:$0xff]
        %v921 = vld [vmem:[%s919 + $0x8] sm:$0xff]
        %v922 = vld [vmem:[%s919 + $0x10] sm:$0xff]
        %v923 = vld [vmem:[%s919 + $0x18] sm:$0xff]
        %s924 = scalar_lea.vmem %s6, 1
        %v925 = vld [vmem:[%s924] sm:$0x1]
        %v927 = vlaneseq
        %v928 = vshrl.u32 %v927, 7
        %v929 = vsub.s32 0, %v928
        %v930 = vrot.slane %v925, %v929
        %932 = vmatprep.subr.mxu0 0.0
        %933 = vmatpush1.msra.mxu0 %v920
        %934 = vmatprep.subr.mxu0 0.0
        %935 = vmatpush1.msra.mxu0 %v921
        %936 = vmatprep.subr.mxu0 0.0
        %937 = vmatpush1.msra.mxu0 %v922
        %938 = vmatprep.subr.mxu0 0.0
        %939 = vmatpush1.msra.mxu0 %v923
        %940 = vmatprep.subr.mxu0 0.0
        %941 = vmatpush1.msra.mxu0 0.0
        %942 = vmatprep.subr.mxu0 0.0
        %943 = vmatpush1.msra.mxu0 0.0
        %944 = vmatprep.subr.mxu0 0.0
        %945 = vmatpush1.msra.mxu0 0.0
        %946 = vmatprep.subr.mxu0 0.0
        %947 = vmatpush1.msra.mxu0 0.0
        %948 = vmatprep.subr.mxu0 0.0
        %949 = vmatpush1.msra.mxu0 0.0
        %950 = vmatprep.subr.mxu0 0.0
        %951 = vmatpush1.msra.mxu0 0.0
        %952 = vmatprep.subr.mxu0 0.0
        %953 = vmatpush1.msra.mxu0 0.0
        %954 = vmatprep.subr.mxu0 0.0
        %955 = vmatpush1.msra.mxu0 0.0
        %956 = vmatprep.subr.mxu0 0.0
        %957 = vmatpush1.msra.mxu0 0.0
        %958 = vmatprep.subr.mxu0 0.0
        %959 = vmatpush1.msra.mxu0 0.0
        %960 = vmatprep.subr.mxu0 0.0
        %961 = vmatpush1.msra.mxu0 0.0
        %962 = vmatprep.subr.mxu0 0.0
        %963 = vmatpush1.msra.mxu0 0.0
        %964 = vmatprep.subr.mxu0 0.0
        %965 = vmatpush1.msra.mxu0 0.0
        %966 = vmatprep.subr.mxu0 0.0
        %967 = vmatpush1.msra.mxu0 0.0
        %968 = vmatprep.subr.mxu0 0.0
        %969 = vmatpush1.msra.mxu0 0.0
        %970 = vmatprep.subr.mxu0 0.0
        %971 = vmatpush1.msra.mxu0 0.0
        %972 = vmatprep.subr.mxu0 0.0
        %973 = vmatpush1.msra.mxu0 0.0
        %974 = vmatprep.subr.mxu0 0.0
        %975 = vmatpush1.msra.mxu0 0.0
        %976 = vmatprep.subr.mxu0 0.0
        %977 = vmatpush1.msra.mxu0 0.0
        %978 = vmatprep.subr.mxu0 0.0
        %979 = vmatpush1.msra.mxu0 0.0
        %980 = vmatprep.subr.mxu0 0.0
        %981 = vmatpush1.msra.mxu0 0.0
        %982 = vmatprep.subr.mxu0 0.0
        %983 = vmatpush1.msra.mxu0 0.0
        %984 = vmatprep.subr.mxu0 0.0
        %985 = vmatpush1.msra.mxu0 0.0
        %986 = vmatprep.subr.mxu0 0.0
        %987 = vmatpush1.msra.mxu0 0.0
        %988 = vmatprep.subr.mxu0 0.0
        %989 = vmatpush1.msra.mxu0 0.0
        %990 = vmatprep.subr.mxu0 0.0
        %991 = vmatpush1.msra.mxu0 0.0
        %992 = vmatprep.subr.mxu0 0.0
        %993 = vmatpush1.msra.mxu0 0.0
        %994 = vmatprep.subr.mxu0 0.0
        %995 = vmatpush1.msra.mxu0 0.0
        %996 = vmatprep.mubr.f32.mxu0 0.0
        %997 = vmatmul.mubr.f32.gmra.mrb[0].mxu0 %v516
        %v998 = vpop.f32.mrb[0].mxu0
        %v999 = vadd.f32 %v930, %v998
        %v1000 = vpop.f32.mrb[0].mxu0
        %1001 = vdwg.mxu0
        %s1002 = scalar_lea.vmem %s7, 32
        %v1003 = vld [vmem:[%s1002] sm:$0xff]
        %v1004 = vld [vmem:[%s1002 + $0x8] sm:$0xff]
        %v1005 = vld [vmem:[%s1002 + $0x10] sm:$0xff]
        %v1006 = vld [vmem:[%s1002 + $0x18] sm:$0xff]
        %s1007 = scalar_lea.vmem %s8, 1
        %v1008 = vld [vmem:[%s1007] sm:$0x1]
        %v1010 = vlaneseq
        %v1011 = vshrl.u32 %v1010, 7
        %v1012 = vsub.s32 0, %v1011
        %v1013 = vrot.slane %v1008, %v1012
        %1015 = vmatprep.subr.mxu0 0.0
        %1016 = vmatpush1.msra.mxu0 %v1003
        %1017 = vmatprep.subr.mxu0 0.0
        %1018 = vmatpush1.msra.mxu0 %v1004
        %1019 = vmatprep.subr.mxu0 0.0
        %1020 = vmatpush1.msra.mxu0 %v1005
        %1021 = vmatprep.subr.mxu0 0.0
        %1022 = vmatpush1.msra.mxu0 %v1006
        %1023 = vmatprep.subr.mxu0 0.0
        %1024 = vmatpush1.msra.mxu0 0.0
        %1025 = vmatprep.subr.mxu0 0.0
        %1026 = vmatpush1.msra.mxu0 0.0
        %1027 = vmatprep.subr.mxu0 0.0
        %1028 = vmatpush1.msra.mxu0 0.0
        %1029 = vmatprep.subr.mxu0 0.0
        %1030 = vmatpush1.msra.mxu0 0.0
        %1031 = vmatprep.subr.mxu0 0.0
        %1032 = vmatpush1.msra.mxu0 0.0
        %1033 = vmatprep.subr.mxu0 0.0
        %1034 = vmatpush1.msra.mxu0 0.0
        %1035 = vmatprep.subr.mxu0 0.0
        %1036 = vmatpush1.msra.mxu0 0.0
        %1037 = vmatprep.subr.mxu0 0.0
        %1038 = vmatpush1.msra.mxu0 0.0
        %1039 = vmatprep.subr.mxu0 0.0
        %1040 = vmatpush1.msra.mxu0 0.0
        %1041 = vmatprep.subr.mxu0 0.0
        %1042 = vmatpush1.msra.mxu0 0.0
        %1043 = vmatprep.subr.mxu0 0.0
        %1044 = vmatpush1.msra.mxu0 0.0
        %1045 = vmatprep.subr.mxu0 0.0
        %1046 = vmatpush1.msra.mxu0 0.0
        %1047 = vmatprep.subr.mxu0 0.0
        %1048 = vmatpush1.msra.mxu0 0.0
        %1049 = vmatprep.subr.mxu0 0.0
        %1050 = vmatpush1.msra.mxu0 0.0
        %1051 = vmatprep.subr.mxu0 0.0
        %1052 = vmatpush1.msra.mxu0 0.0
        %1053 = vmatprep.subr.mxu0 0.0
        %1054 = vmatpush1.msra.mxu0 0.0
        %1055 = vmatprep.subr.mxu0 0.0
        %1056 = vmatpush1.msra.mxu0 0.0
        %1057 = vmatprep.subr.mxu0 0.0
        %1058 = vmatpush1.msra.mxu0 0.0
        %1059 = vmatprep.subr.mxu0 0.0
        %1060 = vmatpush1.msra.mxu0 0.0
        %1061 = vmatprep.subr.mxu0 0.0
        %1062 = vmatpush1.msra.mxu0 0.0
        %1063 = vmatprep.subr.mxu0 0.0
        %1064 = vmatpush1.msra.mxu0 0.0
        %1065 = vmatprep.subr.mxu0 0.0
        %1066 = vmatpush1.msra.mxu0 0.0
        %1067 = vmatprep.subr.mxu0 0.0
        %1068 = vmatpush1.msra.mxu0 0.0
        %1069 = vmatprep.subr.mxu0 0.0
        %1070 = vmatpush1.msra.mxu0 0.0
        %1071 = vmatprep.subr.mxu0 0.0
        %1072 = vmatpush1.msra.mxu0 0.0
        %1073 = vmatprep.subr.mxu0 0.0
        %1074 = vmatpush1.msra.mxu0 0.0
        %1075 = vmatprep.subr.mxu0 0.0
        %1076 = vmatpush1.msra.mxu0 0.0
        %1077 = vmatprep.subr.mxu0 0.0
        %1078 = vmatpush1.msra.mxu0 0.0
        %1079 = vmatprep.mubr.f32.mxu0 0.0
        %1080 = vmatmul.mubr.f32.gmra.mrb[0].mxu0 %v600
        %v1081 = vpop.f32.mrb[0].mxu0
        %v1082 = vadd.f32 %v1013, %v1081
        %v1083 = vpop.f32.mrb[0].mxu0
        %1084 = vdwg.mxu0
        %v1086 = vsel %vm672, %v916, 0
        %v1089 = vsel %vm672, %v999, 0
        %1091 = vmatprep.subr.mxu0 0.0
        %1092 = vmatpush1.xpose.msra.mxu0 %v1089
        %1093 = vmatprep.subr.mxu0 0.0
        %1094 = vmatpush1.xpose.msra.mxu0 0.0
        %1095 = vmatprep.subr.mxu0 0.0
        %1096 = vmatpush1.xpose.msra.mxu0 0.0
        %1097 = vmatprep.subr.mxu0 0.0
        %1098 = vmatpush1.xpose.msra.mxu0 0.0
        %1099 = vmatprep.subr.mxu0 0.0
        %1100 = vmatpush1.xpose.msra.mxu0 0.0
        %1101 = vmatprep.subr.mxu0 0.0
        %1102 = vmatpush1.xpose.msra.mxu0 0.0
        %1103 = vmatprep.subr.mxu0 0.0
        %1104 = vmatpush1.xpose.msra.mxu0 0.0
        %1105 = vmatprep.subr.mxu0 0.0
        %1106 = vmatpush1.xpose.msra.mxu0 0.0
        %1107 = vmatprep.subr.mxu0 0.0
        %1108 = vmatpush1.xpose.msra.mxu0 0.0
        %1109 = vmatprep.subr.mxu0 0.0
        %1110 = vmatpush1.xpose.msra.mxu0 0.0
        %1111 = vmatprep.subr.mxu0 0.0
        %1112 = vmatpush1.xpose.msra.mxu0 0.0
        %1113 = vmatprep.subr.mxu0 0.0
        %1114 = vmatpush1.xpose.msra.mxu0 0.0
        %1115 = vmatprep.subr.mxu0 0.0
        %1116 = vmatpush1.xpose.msra.mxu0 0.0
        %1117 = vmatprep.subr.mxu0 0.0
        %1118 = vmatpush1.xpose.msra.mxu0 0.0
        %1119 = vmatprep.subr.mxu0 0.0
        %1120 = vmatpush1.xpose.msra.mxu0 0.0
        %1121 = vmatprep.subr.mxu0 0.0
        %1122 = vmatpush1.xpose.msra.mxu0 0.0
        %1123 = vmatprep.subr.mxu0 0.0
        %1124 = vmatpush1.xpose.msra.mxu0 0.0
        %1125 = vmatprep.subr.mxu0 0.0
        %1126 = vmatpush1.xpose.msra.mxu0 0.0
        %1127 = vmatprep.subr.mxu0 0.0
        %1128 = vmatpush1.xpose.msra.mxu0 0.0
        %1129 = vmatprep.subr.mxu0 0.0
        %1130 = vmatpush1.xpose.msra.mxu0 0.0
        %1131 = vmatprep.subr.mxu0 0.0
        %1132 = vmatpush1.xpose.msra.mxu0 0.0
        %1133 = vmatprep.subr.mxu0 0.0
        %1134 = vmatpush1.xpose.msra.mxu0 0.0
        %1135 = vmatprep.subr.mxu0 0.0
        %1136 = vmatpush1.xpose.msra.mxu0 0.0
        %1137 = vmatprep.subr.mxu0 0.0
        %1138 = vmatpush1.xpose.msra.mxu0 0.0
        %1139 = vmatprep.subr.mxu0 0.0
        %1140 = vmatpush1.xpose.msra.mxu0 0.0
        %1141 = vmatprep.subr.mxu0 0.0
        %1142 = vmatpush1.xpose.msra.mxu0 0.0
        %1143 = vmatprep.subr.mxu0 0.0
        %1144 = vmatpush1.xpose.msra.mxu0 0.0
        %1145 = vmatprep.subr.mxu0 0.0
        %1146 = vmatpush1.xpose.msra.mxu0 0.0
        %1147 = vmatprep.subr.mxu0 0.0
        %1148 = vmatpush1.xpose.msra.mxu0 0.0
        %1149 = vmatprep.subr.mxu0 0.0
        %1150 = vmatpush1.xpose.msra.mxu0 0.0
        %1151 = vmatprep.subr.mxu0 0.0
        %1152 = vmatpush1.xpose.msra.mxu0 0.0
        %1153 = vmatprep.subr.mxu0 0.0
        %1154 = vmatpush1.xpose.msra.mxu0 0.0
        %1155 = vmatprep.mubr.f32.mxu0 0.0
        %1156 = vmatmul.mubr.f32.gmra.mrb[0].mxu0 %v1086
        %v1157 = vpop.f32.mrb[0].mxu0
        %v1158 = vadd.f32 0.0, %v1157
        %v1159 = vpop.f32.mrb[0].mxu0
        %1160 = vdwg.mxu0
        %v1161 = vsel %vm749, %v1158, -inf
        %1162 = vmax.xlane.f32.xlu0 %v1161
        %v1163 = vpop.xlane.xlu0 %1162
        %v1164 = vsub.f32 %v1158, %v1163
        %v1165 = vmul.f32 %v1164, 1.442695
        %v1166 = vpow.pop %v1165
        %v1167 = vsel %vm749, %v1166, 0.0
        %1168 = vadd.xlane.f32.xlu0 %v1167
        %v1169 = vpop.xlane.xlu0 %1168
        %v1170 = vrcp.pop %v1169
        %v1171 = vmul.f32 %v1166, %v1170
        %v1173 = vsel %vm749, %v1171, 0
        %1175 = vmatprep.subr.mxu0 0.0
        %1176 = vmatpush1.msra.mxu0 %v1082
        %1177 = vmatprep.subr.mxu0 0.0
        %1178 = vmatpush1.msra.mxu0 0.0
        %1179 = vmatprep.subr.mxu0 0.0
        %1180 = vmatpush1.msra.mxu0 0.0
        %1181 = vmatprep.subr.mxu0 0.0
        %1182 = vmatpush1.msra.mxu0 0.0
        %1183 = vmatprep.subr.mxu0 0.0
        %1184 = vmatpush1.msra.mxu0 0.0
        %1185 = vmatprep.subr.mxu0 0.0
        %1186 = vmatpush1.msra.mxu0 0.0
        %1187 = vmatprep.subr.mxu0 0.0
        %1188 = vmatpush1.msra.mxu0 0.0
        %1189 = vmatprep.subr.mxu0 0.0
        %1190 = vmatpush1.msra.mxu0 0.0
        %1191 = vmatprep.subr.mxu0 0.0
        %1192 = vmatpush1.msra.mxu0 0.0
        %1193 = vmatprep.subr.mxu0 0.0
        %1194 = vmatpush1.msra.mxu0 0.0
        %1195 = vmatprep.subr.mxu0 0.0
        %1196 = vmatpush1.msra.mxu0 0.0
        %1197 = vmatprep.subr.mxu0 0.0
        %1198 = vmatpush1.msra.mxu0 0.0
        %1199 = vmatprep.subr.mxu0 0.0
        %1200 = vmatpush1.msra.mxu0 0.0
        %1201 = vmatprep.subr.mxu0 0.0
        %1202 = vmatpush1.msra.mxu0 0.0
        %1203 = vmatprep.subr.mxu0 0.0
        %1204 = vmatpush1.msra.mxu0 0.0
        %1205 = vmatprep.subr.mxu0 0.0
        %1206 = vmatpush1.msra.mxu0 0.0
        %1207 = vmatprep.subr.mxu0 0.0
        %1208 = vmatpush1.msra.mxu0 0.0
        %1209 = vmatprep.subr.mxu0 0.0
        %1210 = vmatpush1.msra.mxu0 0.0
        %1211 = vmatprep.subr.mxu0 0.0
        %1212 = vmatpush1.msra.mxu0 0.0
        %1213 = vmatprep.subr.mxu0 0.0
        %1214 = vmatpush1.msra.mxu0 0.0
        %1215 = vmatprep.subr.mxu0 0.0
        %1216 = vmatpush1.msra.mxu0 0.0
        %1217 = vmatprep.subr.mxu0 0.0
        %1218 = vmatpush1.msra.mxu0 0.0
        %1219 = vmatprep.subr.mxu0 0.0
        %1220 = vmatpush1.msra.mxu0 0.0
        %1221 = vmatprep.subr.mxu0 0.0
        %1222 = vmatpush1.msra.mxu0 0.0
        %1223 = vmatprep.subr.mxu0 0.0
        %1224 = vmatpush1.msra.mxu0 0.0
        %1225 = vmatprep.subr.mxu0 0.0
        %1226 = vmatpush1.msra.mxu0 0.0
        %1227 = vmatprep.subr.mxu0 0.0
        %1228 = vmatpush1.msra.mxu0 0.0
        %1229 = vmatprep.subr.mxu0 0.0
        %1230 = vmatpush1.msra.mxu0 0.0
        %1231 = vmatprep.subr.mxu0 0.0
        %1232 = vmatpush1.msra.mxu0 0.0
        %1233 = vmatprep.subr.mxu0 0.0
        %1234 = vmatpush1.msra.mxu0 0.0
        %1235 = vmatprep.subr.mxu0 0.0
        %1236 = vmatpush1.msra.mxu0 0.0
        %1237 = vmatprep.subr.mxu0 0.0
        %1238 = vmatpush1.msra.mxu0 0.0
        %1239 = vmatprep.mubr.f32.mxu0 0.0
        %1240 = vmatmul.mubr.f32.gmra.mrb[0].mxu0 %v1173
        %v1241 = vpop.f32.mrb[0].mxu0
        %v1242 = vadd.f32 0.0, %v1241
        %v1243 = vpop.f32.mrb[0].mxu0
        %1244 = vdwg.mxu0
        %s1245 = scalar_lea.vmem %s9, 16
        %v1246 = vld [vmem:[%s1245] sm:$0xff]
        %v1247 = vld [vmem:[%s1245 + $0x8] sm:$0xff]
        %v1249 = vsel %vm672, %v1242, 0
        %1251 = vmatprep.subr.mxu0 0.0
        %1252 = vmatpush1.msra.mxu0 %v1246
        %1253 = vmatprep.subr.mxu0 0.0
        %1254 = vmatpush1.msra.mxu0 %v1247
        %1255 = vmatprep.subr.mxu0 0.0
        %1256 = vmatpush1.msra.mxu0 0.0
        %1257 = vmatprep.subr.mxu0 0.0
        %1258 = vmatpush1.msra.mxu0 0.0
        %1259 = vmatprep.subr.mxu0 0.0
        %1260 = vmatpush1.msra.mxu0 0.0
        %1261 = vmatprep.subr.mxu0 0.0
        %1262 = vmatpush1.msra.mxu0 0.0
        %1263 = vmatprep.subr.mxu0 0.0
        %1264 = vmatpush1.msra.mxu0 0.0
        %1265 = vmatprep.subr.mxu0 0.0
        %1266 = vmatpush1.msra.mxu0 0.0
        %1267 = vmatprep.subr.mxu0 0.0
        %1268 = vmatpush1.msra.mxu0 0.0
        %1269 = vmatprep.subr.mxu0 0.0
        %1270 = vmatpush1.msra.mxu0 0.0
        %1271 = vmatprep.subr.mxu0 0.0
        %1272 = vmatpush1.msra.mxu0 0.0
        %1273 = vmatprep.subr.mxu0 0.0
        %1274 = vmatpush1.msra.mxu0 0.0
        %1275 = vmatprep.subr.mxu0 0.0
        %1276 = vmatpush1.msra.mxu0 0.0
        %1277 = vmatprep.subr.mxu0 0.0
        %1278 = vmatpush1.msra.mxu0 0.0
        %1279 = vmatprep.subr.mxu0 0.0
        %1280 = vmatpush1.msra.mxu0 0.0
        %1281 = vmatprep.subr.mxu0 0.0
        %1282 = vmatpush1.msra.mxu0 0.0
        %1283 = vmatprep.subr.mxu0 0.0
        %1284 = vmatpush1.msra.mxu0 0.0
        %1285 = vmatprep.subr.mxu0 0.0
        %1286 = vmatpush1.msra.mxu0 0.0
        %1287 = vmatprep.subr.mxu0 0.0
        %1288 = vmatpush1.msra.mxu0 0.0
        %1289 = vmatprep.subr.mxu0 0.0
        %1290 = vmatpush1.msra.mxu0 0.0
        %1291 = vmatprep.subr.mxu0 0.0
        %1292 = vmatpush1.msra.mxu0 0.0
        %1293 = vmatprep.subr.mxu0 0.0
        %1294 = vmatpush1.msra.mxu0 0.0
        %1295 = vmatprep.subr.mxu0 0.0
        %1296 = vmatpush1.msra.mxu0 0.0
        %1297 = vmatprep.subr.mxu0 0.0
        %1298 = vmatpush1.msra.mxu0 0.0
        %1299 = vmatprep.subr.mxu0 0.0
        %1300 = vmatpush1.msra.mxu0 0.0
        %1301 = vmatprep.subr.mxu0 0.0
        %1302 = vmatpush1.msra.mxu0 0.0
        %1303 = vmatprep.subr.mxu0 0.0
        %1304 = vmatpush1.msra.mxu0 0.0
        %1305 = vmatprep.subr.mxu0 0.0
        %1306 = vmatpush1.msra.mxu0 0.0
        %1307 = vmatprep.subr.mxu0 0.0
        %1308 = vmatpush1.msra.mxu0 0.0
        %1309 = vmatprep.subr.mxu0 0.0
        %1310 = vmatpush1.msra.mxu0 0.0
        %1311 = vmatprep.subr.mxu0 0.0
        %1312 = vmatpush1.msra.mxu0 0.0
        %1313 = vmatprep.subr.mxu0 0.0
        %1314 = vmatpush1.msra.mxu0 0.0
        %1315 = vmatprep.mubr.f32.mxu0 0.0
        %1316 = vmatmul.mubr.f32.gmra.mrb[0].mxu0 %v1249
        %v1317 = vpop.f32.mrb[0].mxu0
        %v1318 = vadd.f32 0.0, %v1317
        %v1319 = vpop.f32.mrb[0].mxu0
        %1320 = vdwg.mxu0
        %v1322 = vsel %vm672, %v831, 0
        %1324 = vmatprep.subr.mxu0 0.0
        %1325 = vmatpush1.msra.mxu0 %v834
        %1326 = vmatprep.subr.mxu0 0.0
        %1327 = vmatpush1.msra.mxu0 %v835
        %1328 = vmatprep.subr.mxu0 0.0
        %1329 = vmatpush1.msra.mxu0 0.0
        %1330 = vmatprep.subr.mxu0 0.0
        %1331 = vmatpush1.msra.mxu0 0.0
        %1332 = vmatprep.subr.mxu0 0.0
        %1333 = vmatpush1.msra.mxu0 0.0
        %1334 = vmatprep.subr.mxu0 0.0
        %1335 = vmatpush1.msra.mxu0 0.0
        %1336 = vmatprep.subr.mxu0 0.0
        %1337 = vmatpush1.msra.mxu0 0.0
        %1338 = vmatprep.subr.mxu0 0.0
        %1339 = vmatpush1.msra.mxu0 0.0
        %1340 = vmatprep.subr.mxu0 0.0
        %1341 = vmatpush1.msra.mxu0 0.0
        %1342 = vmatprep.subr.mxu0 0.0
        %1343 = vmatpush1.msra.mxu0 0.0
        %1344 = vmatprep.subr.mxu0 0.0
        %1345 = vmatpush1.msra.mxu0 0.0
        %1346 = vmatprep.subr.mxu0 0.0
        %1347 = vmatpush1.msra.mxu0 0.0
        %1348 = vmatprep.subr.mxu0 0.0
        %1349 = vmatpush1.msra.mxu0 0.0
        %1350 = vmatprep.subr.mxu0 0.0
        %1351 = vmatpush1.msra.mxu0 0.0
        %1352 = vmatprep.subr.mxu0 0.0
        %1353 = vmatpush1.msra.mxu0 0.0
        %1354 = vmatprep.subr.mxu0 0.0
        %1355 = vmatpush1.msra.mxu0 0.0
        %1356 = vmatprep.subr.mxu0 0.0
        %1357 = vmatpush1.msra.mxu0 0.0
        %1358 = vmatprep.subr.mxu0 0.0
        %1359 = vmatpush1.msra.mxu0 0.0
        %1360 = vmatprep.subr.mxu0 0.0
        %1361 = vmatpush1.msra.mxu0 0.0
        %1362 = vmatprep.subr.mxu0 0.0
        %1363 = vmatpush1.msra.mxu0 0.0
        %1364 = vmatprep.subr.mxu0 0.0
        %1365 = vmatpush1.msra.mxu0 0.0
        %1366 = vmatprep.subr.mxu0 0.0
        %1367 = vmatpush1.msra.mxu0 0.0
        %1368 = vmatprep.subr.mxu0 0.0
        %1369 = vmatpush1.msra.mxu0 0.0
        %1370 = vmatprep.subr.mxu0 0.0
        %1371 = vmatpush1.msra.mxu0 0.0
        %1372 = vmatprep.subr.mxu0 0.0
        %1373 = vmatpush1.msra.mxu0 0.0
        %1374 = vmatprep.subr.mxu0 0.0
        %1375 = vmatpush1.msra.mxu0 0.0
        %1376 = vmatprep.subr.mxu0 0.0
        %1377 = vmatpush1.msra.mxu0 0.0
        %1378 = vmatprep.subr.mxu0 0.0
        %1379 = vmatpush1.msra.mxu0 0.0
        %1380 = vmatprep.subr.mxu0 0.0
        %1381 = vmatpush1.msra.mxu0 0.0
        %1382 = vmatprep.subr.mxu0 0.0
        %1383 = vmatpush1.msra.mxu0 0.0
        %1384 = vmatprep.subr.mxu0 0.0
        %1385 = vmatpush1.msra.mxu0 0.0
        %1386 = vmatprep.subr.mxu0 0.0
        %1387 = vmatpush1.msra.mxu0 0.0
        %1388 = vmatprep.mubr.f32.mxu0 0.0
        %1389 = vmatmul.mubr.f32.gmra.mrb[0].mxu0 %v1322
        %v1390 = vpop.f32.mrb[0].mxu0
        %v1391 = vadd.f32 %v1318, %v1390
        %v1392 = vpop.f32.mrb[0].mxu0
        %1393 = vdwg.mxu0
        %s1394 = scalar_lea.vmem %s3, 64
        %v1395 = vld [vmem:[%s1394] sm:$0xff]
        %v1396 = vld [vmem:[%s1394 + $0x8] sm:$0xff]
        %v1397 = vld [vmem:[%s1394 + $0x10] sm:$0xff]
        %v1398 = vld [vmem:[%s1394 + $0x18] sm:$0xff]
        %s1399 = scalar_lea.vmem %s4, 2
        %v1400 = vld [vmem:[%s1399] sm:$0x1]
        %v1402 = vlaneseq
        %v1403 = vshrl.u32 %v1402, 7
        %v1404 = vsub.s32 0, %v1403
        %v1405 = vrot.slane %v1400, %v1404
        %1407 = vmatprep.subr.mxu0 0.0
        %1408 = vmatpush1.msra.mxu0 %v1395
        %1409 = vmatprep.subr.mxu0 0.0
        %1410 = vmatpush1.msra.mxu0 %v1396
        %1411 = vmatprep.subr.mxu0 0.0
        %1412 = vmatpush1.msra.mxu0 %v1397
        %1413 = vmatprep.subr.mxu0 0.0
        %1414 = vmatpush1.msra.mxu0 %v1398
        %1415 = vmatprep.subr.mxu0 0.0
        %1416 = vmatpush1.msra.mxu0 0.0
        %1417 = vmatprep.subr.mxu0 0.0
        %1418 = vmatpush1.msra.mxu0 0.0
        %1419 = vmatprep.subr.mxu0 0.0
        %1420 = vmatpush1.msra.mxu0 0.0
        %1421 = vmatprep.subr.mxu0 0.0
        %1422 = vmatpush1.msra.mxu0 0.0
        %1423 = vmatprep.subr.mxu0 0.0
        %1424 = vmatpush1.msra.mxu0 0.0
        %1425 = vmatprep.subr.mxu0 0.0
        %1426 = vmatpush1.msra.mxu0 0.0
        %1427 = vmatprep.subr.mxu0 0.0
        %1428 = vmatpush1.msra.mxu0 0.0
        %1429 = vmatprep.subr.mxu0 0.0
        %1430 = vmatpush1.msra.mxu0 0.0
        %1431 = vmatprep.subr.mxu0 0.0
        %1432 = vmatpush1.msra.mxu0 0.0
        %1433 = vmatprep.subr.mxu0 0.0
        %1434 = vmatpush1.msra.mxu0 0.0
        %1435 = vmatprep.subr.mxu0 0.0
        %1436 = vmatpush1.msra.mxu0 0.0
        %1437 = vmatprep.subr.mxu0 0.0
        %1438 = vmatpush1.msra.mxu0 0.0
        %1439 = vmatprep.subr.mxu0 0.0
        %1440 = vmatpush1.msra.mxu0 0.0
        %1441 = vmatprep.subr.mxu0 0.0
        %1442 = vmatpush1.msra.mxu0 0.0
        %1443 = vmatprep.subr.mxu0 0.0
        %1444 = vmatpush1.msra.mxu0 0.0
        %1445 = vmatprep.subr.mxu0 0.0
        %1446 = vmatpush1.msra.mxu0 0.0
        %1447 = vmatprep.subr.mxu0 0.0
        %1448 = vmatpush1.msra.mxu0 0.0
        %1449 = vmatprep.subr.mxu0 0.0
        %1450 = vmatpush1.msra.mxu0 0.0
        %1451 = vmatprep.subr.mxu0 0.0
        %1452 = vmatpush1.msra.mxu0 0.0
        %1453 = vmatprep.subr.mxu0 0.0
        %1454 = vmatpush1.msra.mxu0 0.0
        %1455 = vmatprep.subr.mxu0 0.0
        %1456 = vmatpush1.msra.mxu0 0.0
        %1457 = vmatprep.subr.mxu0 0.0
        %1458 = vmatpush1.msra.mxu0 0.0
        %1459 = vmatprep.subr.mxu0 0.0
        %1460 = vmatpush1.msra.mxu0 0.0
        %1461 = vmatprep.subr.mxu0 0.0
        %1462 = vmatpush1.msra.mxu0 0.0
        %1463 = vmatprep.subr.mxu0 0.0
        %1464 = vmatpush1.msra.mxu0 0.0
        %1465 = vmatprep.subr.mxu0 0.0
        %1466 = vmatpush1.msra.mxu0 0.0
        %1467 = vmatprep.subr.mxu0 0.0
        %1468 = vmatpush1.msra.mxu0 0.0
        %1469 = vmatprep.subr.mxu0 0.0
        %1470 = vmatpush1.msra.mxu0 0.0
        %1471 = vmatprep.mubr.f32.mxu0 0.0
        %1472 = vmatmul.mubr.f32.gmra.mrb[0].mxu0 %v432
        %v1473 = vpop.f32.mrb[0].mxu0
        %v1474 = vadd.f32 %v1405, %v1473
        %v1475 = vpop.f32.mrb[0].mxu0
        %1476 = vdwg.mxu0
        %s1477 = scalar_lea.vmem %s5, 64
        %v1478 = vld [vmem:[%s1477] sm:$0xff]
        %v1479 = vld [vmem:[%s1477 + $0x8] sm:$0xff]
        %v1480 = vld [vmem:[%s1477 + $0x10] sm:$0xff]
        %v1481 = vld [vmem:[%s1477 + $0x18] sm:$0xff]
        %s1482 = scalar_lea.vmem %s6, 2
        %v1483 = vld [vmem:[%s1482] sm:$0x1]
        %v1485 = vlaneseq
        %v1486 = vshrl.u32 %v1485, 7
        %v1487 = vsub.s32 0, %v1486
        %v1488 = vrot.slane %v1483, %v1487
        %1490 = vmatprep.subr.mxu0 0.0
        %1491 = vmatpush1.msra.mxu0 %v1478
        %1492 = vmatprep.subr.mxu0 0.0
        %1493 = vmatpush1.msra.mxu0 %v1479
        %1494 = vmatprep.subr.mxu0 0.0
        %1495 = vmatpush1.msra.mxu0 %v1480
        %1496 = vmatprep.subr.mxu0 0.0
        %1497 = vmatpush1.msra.mxu0 %v1481
        %1498 = vmatprep.subr.mxu0 0.0
        %1499 = vmatpush1.msra.mxu0 0.0
        %1500 = vmatprep.subr.mxu0 0.0
        %1501 = vmatpush1.msra.mxu0 0.0
        %1502 = vmatprep.subr.mxu0 0.0
        %1503 = vmatpush1.msra.mxu0 0.0
        %1504 = vmatprep.subr.mxu0 0.0
        %1505 = vmatpush1.msra.mxu0 0.0
        %1506 = vmatprep.subr.mxu0 0.0
        %1507 = vmatpush1.msra.mxu0 0.0
        %1508 = vmatprep.subr.mxu0 0.0
        %1509 = vmatpush1.msra.mxu0 0.0
        %1510 = vmatprep.subr.mxu0 0.0
        %1511 = vmatpush1.msra.mxu0 0.0
        %1512 = vmatprep.subr.mxu0 0.0
        %1513 = vmatpush1.msra.mxu0 0.0
        %1514 = vmatprep.subr.mxu0 0.0
        %1515 = vmatpush1.msra.mxu0 0.0
        %1516 = vmatprep.subr.mxu0 0.0
        %1517 = vmatpush1.msra.mxu0 0.0
        %1518 = vmatprep.subr.mxu0 0.0
        %1519 = vmatpush1.msra.mxu0 0.0
        %1520 = vmatprep.subr.mxu0 0.0
        %1521 = vmatpush1.msra.mxu0 0.0
        %1522 = vmatprep.subr.mxu0 0.0
        %1523 = vmatpush1.msra.mxu0 0.0
        %1524 = vmatprep.subr.mxu0 0.0
        %1525 = vmatpush1.msra.mxu0 0.0
        %1526 = vmatprep.subr.mxu0 0.0
        %1527 = vmatpush1.msra.mxu0 0.0
        %1528 = vmatprep.subr.mxu0 0.0
        %1529 = vmatpush1.msra.mxu0 0.0
        %1530 = vmatprep.subr.mxu0 0.0
        %1531 = vmatpush1.msra.mxu0 0.0
        %1532 = vmatprep.subr.mxu0 0.0
        %1533 = vmatpush1.msra.mxu0 0.0
        %1534 = vmatprep.subr.mxu0 0.0
        %1535 = vmatpush1.msra.mxu0 0.0
        %1536 = vmatprep.subr.mxu0 0.0
        %1537 = vmatpush1.msra.mxu0 0.0
        %1538 = vmatprep.subr.mxu0 0.0
        %1539 = vmatpush1.msra.mxu0 0.0
        %1540 = vmatprep.subr.mxu0 0.0
        %1541 = vmatpush1.msra.mxu0 0.0
        %1542 = vmatprep.subr.mxu0 0.0
        %1543 = vmatpush1.msra.mxu0 0.0
        %1544 = vmatprep.subr.mxu0 0.0
        %1545 = vmatpush1.msra.mxu0 0.0
        %1546 = vmatprep.subr.mxu0 0.0
        %1547 = vmatpush1.msra.mxu0 0.0
        %1548 = vmatprep.subr.mxu0 0.0
        %1549 = vmatpush1.msra.mxu0 0.0
        %1550 = vmatprep.subr.mxu0 0.0
        %1551 = vmatpush1.msra.mxu0 0.0
        %1552 = vmatprep.subr.mxu0 0.0
        %1553 = vmatpush1.msra.mxu0 0.0
        %1554 = vmatprep.mubr.f32.mxu0 0.0
        %1555 = vmatmul.mubr.f32.gmra.mrb[0].mxu0 %v516
        %v1556 = vpop.f32.mrb[0].mxu0
        %v1557 = vadd.f32 %v1488, %v1556
        %v1558 = vpop.f32.mrb[0].mxu0
        %1559 = vdwg.mxu0
        %s1560 = scalar_lea.vmem %s7, 64
        %v1561 = vld [vmem:[%s1560] sm:$0xff]
        %v1562 = vld [vmem:[%s1560 + $0x8] sm:$0xff]
        %v1563 = vld [vmem:[%s1560 + $0x10] sm:$0xff]
        %v1564 = vld [vmem:[%s1560 + $0x18] sm:$0xff]
        %s1565 = scalar_lea.vmem %s8, 2
        %v1566 = vld [vmem:[%s1565] sm:$0x1]
        %v1568 = vlaneseq
        %v1569 = vshrl.u32 %v1568, 7
        %v1570 = vsub.s32 0, %v1569
        %v1571 = vrot.slane %v1566, %v1570
        %1573 = vmatprep.subr.mxu0 0.0
        %1574 = vmatpush1.msra.mxu0 %v1561
        %1575 = vmatprep.subr.mxu0 0.0
        %1576 = vmatpush1.msra.mxu0 %v1562
        %1577 = vmatprep.subr.mxu0 0.0
        %1578 = vmatpush1.msra.mxu0 %v1563
        %1579 = vmatprep.subr.mxu0 0.0
        %1580 = vmatpush1.msra.mxu0 %v1564
        %1581 = vmatprep.subr.mxu0 0.0
        %1582 = vmatpush1.msra.mxu0 0.0
        %1583 = vmatprep.subr.mxu0 0.0
        %1584 = vmatpush1.msra.mxu0 0.0
        %1585 = vmatprep.subr.mxu0 0.0
        %1586 = vmatpush1.msra.mxu0 0.0
        %1587 = vmatprep.subr.mxu0 0.0
        %1588 = vmatpush1.msra.mxu0 0.0
        %1589 = vmatprep.subr.mxu0 0.0
        %1590 = vmatpush1.msra.mxu0 0.0
        %1591 = vmatprep.subr.mxu0 0.0
        %1592 = vmatpush1.msra.mxu0 0.0
        %1593 = vmatprep.subr.mxu0 0.0
        %1594 = vmatpush1.msra.mxu0 0.0
        %1595 = vmatprep.subr.mxu0 0.0
        %1596 = vmatpush1.msra.mxu0 0.0
        %1597 = vmatprep.subr.mxu0 0.0
        %1598 = vmatpush1.msra.mxu0 0.0
        %1599 = vmatprep.subr.mxu0 0.0
        %1600 = vmatpush1.msra.mxu0 0.0
        %1601 = vmatprep.subr.mxu0 0.0
        %1602 = vmatpush1.msra.mxu0 0.0
        %1603 = vmatprep.subr.mxu0 0.0
        %1604 = vmatpush1.msra.mxu0 0.0
        %1605 = vmatprep.subr.mxu0 0.0
        %1606 = vmatpush1.msra.mxu0 0.0
        %1607 = vmatprep.subr.mxu0 0.0
        %1608 = vmatpush1.msra.mxu0 0.0
        %1609 = vmatprep.subr.mxu0 0.0
        %1610 = vmatpush1.msra.mxu0 0.0
        %1611 = vmatprep.subr.mxu0 0.0
        %1612 = vmatpush1.msra.mxu0 0.0
        %1613 = vmatprep.subr.mxu0 0.0
        %1614 = vmatpush1.msra.mxu0 0.0
        %1615 = vmatprep.subr.mxu0 0.0
        %1616 = vmatpush1.msra.mxu0 0.0
        %1617 = vmatprep.subr.mxu0 0.0
        %1618 = vmatpush1.msra.mxu0 0.0
        %1619 = vmatprep.subr.mxu0 0.0
        %1620 = vmatpush1.msra.mxu0 0.0
        %1621 = vmatprep.subr.mxu0 0.0
        %1622 = vmatpush1.msra.mxu0 0.0
        %1623 = vmatprep.subr.mxu0 0.0
        %1624 = vmatpush1.msra.mxu0 0.0
        %1625 = vmatprep.subr.mxu0 0.0
        %1626 = vmatpush1.msra.mxu0 0.0
        %1627 = vmatprep.subr.mxu0 0.0
        %1628 = vmatpush1.msra.mxu0 0.0
        %1629 = vmatprep.subr.mxu0 0.0
        %1630 = vmatpush1.msra.mxu0 0.0
        %1631 = vmatprep.subr.mxu0 0.0
        %1632 = vmatpush1.msra.mxu0 0.0
        %1633 = vmatprep.subr.mxu0 0.0
        %1634 = vmatpush1.msra.mxu0 0.0
        %1635 = vmatprep.subr.mxu0 0.0
        %1636 = vmatpush1.msra.mxu0 0.0
        %1637 = vmatprep.mubr.f32.mxu0 0.0
        %1638 = vmatmul.mubr.f32.gmra.mrb[0].mxu0 %v600
        %v1639 = vpop.f32.mrb[0].mxu0
        %v1640 = vadd.f32 %v1571, %v1639
        %v1641 = vpop.f32.mrb[0].mxu0
        %1642 = vdwg.mxu0
        %v1644 = vsel %vm672, %v1474, 0
        %v1647 = vsel %vm672, %v1557, 0
        %1649 = vmatprep.subr.mxu0 0.0
        %1650 = vmatpush1.xpose.msra.mxu0 %v1647
        %1651 = vmatprep.subr.mxu0 0.0
        %1652 = vmatpush1.xpose.msra.mxu0 0.0
        %1653 = vmatprep.subr.mxu0 0.0
        %1654 = vmatpush1.xpose.msra.mxu0 0.0
        %1655 = vmatprep.subr.mxu0 0.0
        %1656 = vmatpush1.xpose.msra.mxu0 0.0
        %1657 = vmatprep.subr.mxu0 0.0
        %1658 = vmatpush1.xpose.msra.mxu0 0.0
        %1659 = vmatprep.subr.mxu0 0.0
        %1660 = vmatpush1.xpose.msra.mxu0 0.0
        %1661 = vmatprep.subr.mxu0 0.0
        %1662 = vmatpush1.xpose.msra.mxu0 0.0
        %1663 = vmatprep.subr.mxu0 0.0
        %1664 = vmatpush1.xpose.msra.mxu0 0.0
        %1665 = vmatprep.subr.mxu0 0.0
        %1666 = vmatpush1.xpose.msra.mxu0 0.0
        %1667 = vmatprep.subr.mxu0 0.0
        %1668 = vmatpush1.xpose.msra.mxu0 0.0
        %1669 = vmatprep.subr.mxu0 0.0
        %1670 = vmatpush1.xpose.msra.mxu0 0.0
        %1671 = vmatprep.subr.mxu0 0.0
        %1672 = vmatpush1.xpose.msra.mxu0 0.0
        %1673 = vmatprep.subr.mxu0 0.0
        %1674 = vmatpush1.xpose.msra.mxu0 0.0
        %1675 = vmatprep.subr.mxu0 0.0
        %1676 = vmatpush1.xpose.msra.mxu0 0.0
        %1677 = vmatprep.subr.mxu0 0.0
        %1678 = vmatpush1.xpose.msra.mxu0 0.0
        %1679 = vmatprep.subr.mxu0 0.0
        %1680 = vmatpush1.xpose.msra.mxu0 0.0
        %1681 = vmatprep.subr.mxu0 0.0
        %1682 = vmatpush1.xpose.msra.mxu0 0.0
        %1683 = vmatprep.subr.mxu0 0.0
        %1684 = vmatpush1.xpose.msra.mxu0 0.0
        %1685 = vmatprep.subr.mxu0 0.0
        %1686 = vmatpush1.xpose.msra.mxu0 0.0
        %1687 = vmatprep.subr.mxu0 0.0
        %1688 = vmatpush1.xpose.msra.mxu0 0.0
        %1689 = vmatprep.subr.mxu0 0.0
        %1690 = vmatpush1.xpose.msra.mxu0 0.0
        %1691 = vmatprep.subr.mxu0 0.0
        %1692 = vmatpush1.xpose.msra.mxu0 0.0
        %1693 = vmatprep.subr.mxu0 0.0
        %1694 = vmatpush1.xpose.msra.mxu0 0.0
        %1695 = vmatprep.subr.mxu0 0.0
        %1696 = vmatpush1.xpose.msra.mxu0 0.0
        %1697 = vmatprep.subr.mxu0 0.0
        %1698 = vmatpush1.xpose.msra.mxu0 0.0
        %1699 = vmatprep.subr.mxu0 0.0
        %1700 = vmatpush1.xpose.msra.mxu0 0.0
        %1701 = vmatprep.subr.mxu0 0.0
        %1702 = vmatpush1.xpose.msra.mxu0 0.0
        %1703 = vmatprep.subr.mxu0 0.0
        %1704 = vmatpush1.xpose.msra.mxu0 0.0
        %1705 = vmatprep.subr.mxu0 0.0
        %1706 = vmatpush1.xpose.msra.mxu0 0.0
        %1707 = vmatprep.subr.mxu0 0.0
        %1708 = vmatpush1.xpose.msra.mxu0 0.0
        %1709 = vmatprep.subr.mxu0 0.0
        %1710 = vmatpush1.xpose.msra.mxu0 0.0
        %1711 = vmatprep.subr.mxu0 0.0
        %1712 = vmatpush1.xpose.msra.mxu0 0.0
        %1713 = vmatprep.mubr.f32.mxu0 0.0
        %1714 = vmatmul.mubr.f32.gmra.mrb[0].mxu0 %v1644
        %v1715 = vpop.f32.mrb[0].mxu0
        %v1716 = vadd.f32 0.0, %v1715
        %v1717 = vpop.f32.mrb[0].mxu0
        %1718 = vdwg.mxu0
        %v1719 = vsel %vm749, %v1716, -inf
        %1720 = vmax.xlane.f32.xlu0 %v1719
        %v1721 = vpop.xlane.xlu0 %1720
        %v1722 = vsub.f32 %v1716, %v1721
        %v1723 = vmul.f32 %v1722, 1.442695
        %v1724 = vpow.pop %v1723
        %v1725 = vsel %vm749, %v1724, 0.0
        %1726 = vadd.xlane.f32.xlu0 %v1725
        %v1727 = vpop.xlane.xlu0 %1726
        %v1728 = vrcp.pop %v1727
        %v1729 = vmul.f32 %v1724, %v1728
        %v1731 = vsel %vm749, %v1729, 0
        %1733 = vmatprep.subr.mxu0 0.0
        %1734 = vmatpush1.msra.mxu0 %v1640
        %1735 = vmatprep.subr.mxu0 0.0
        %1736 = vmatpush1.msra.mxu0 0.0
        %1737 = vmatprep.subr.mxu0 0.0
        %1738 = vmatpush1.msra.mxu0 0.0
        %1739 = vmatprep.subr.mxu0 0.0
        %1740 = vmatpush1.msra.mxu0 0.0
        %1741 = vmatprep.subr.mxu0 0.0
        %1742 = vmatpush1.msra.mxu0 0.0
        %1743 = vmatprep.subr.mxu0 0.0
        %1744 = vmatpush1.msra.mxu0 0.0
        %1745 = vmatprep.subr.mxu0 0.0
        %1746 = vmatpush1.msra.mxu0 0.0
        %1747 = vmatprep.subr.mxu0 0.0
        %1748 = vmatpush1.msra.mxu0 0.0
        %1749 = vmatprep.subr.mxu0 0.0
        %1750 = vmatpush1.msra.mxu0 0.0
        %1751 = vmatprep.subr.mxu0 0.0
        %1752 = vmatpush1.msra.mxu0 0.0
        %1753 = vmatprep.subr.mxu0 0.0
        %1754 = vmatpush1.msra.mxu0 0.0
        %1755 = vmatprep.subr.mxu0 0.0
        %1756 = vmatpush1.msra.mxu0 0.0
        %1757 = vmatprep.subr.mxu0 0.0
        %1758 = vmatpush1.msra.mxu0 0.0
        %1759 = vmatprep.subr.mxu0 0.0
        %1760 = vmatpush1.msra.mxu0 0.0
        %1761 = vmatprep.subr.mxu0 0.0
        %1762 = vmatpush1.msra.mxu0 0.0
        %1763 = vmatprep.subr.mxu0 0.0
        %1764 = vmatpush1.msra.mxu0 0.0
        %1765 = vmatprep.subr.mxu0 0.0
        %1766 = vmatpush1.msra.mxu0 0.0
        %1767 = vmatprep.subr.mxu0 0.0
        %1768 = vmatpush1.msra.mxu0 0.0
        %1769 = vmatprep.subr.mxu0 0.0
        %1770 = vmatpush1.msra.mxu0 0.0
        %1771 = vmatprep.subr.mxu0 0.0
        %1772 = vmatpush1.msra.mxu0 0.0
        %1773 = vmatprep.subr.mxu0 0.0
        %1774 = vmatpush1.msra.mxu0 0.0
        %1775 = vmatprep.subr.mxu0 0.0
        %1776 = vmatpush1.msra.mxu0 0.0
        %1777 = vmatprep.subr.mxu0 0.0
        %1778 = vmatpush1.msra.mxu0 0.0
        %1779 = vmatprep.subr.mxu0 0.0
        %1780 = vmatpush1.msra.mxu0 0.0
        %1781 = vmatprep.subr.mxu0 0.0
        %1782 = vmatpush1.msra.mxu0 0.0
        %1783 = vmatprep.subr.mxu0 0.0
        %1784 = vmatpush1.msra.mxu0 0.0
        %1785 = vmatprep.subr.mxu0 0.0
        %1786 = vmatpush1.msra.mxu0 0.0
        %1787 = vmatprep.subr.mxu0 0.0
        %1788 = vmatpush1.msra.mxu0 0.0
        %1789 = vmatprep.subr.mxu0 0.0
        %1790 = vmatpush1.msra.mxu0 0.0
        %1791 = vmatprep.subr.mxu0 0.0
        %1792 = vmatpush1.msra.mxu0 0.0
        %1793 = vmatprep.subr.mxu0 0.0
        %1794 = vmatpush1.msra.mxu0 0.0
        %1795 = vmatprep.subr.mxu0 0.0
        %1796 = vmatpush1.msra.mxu0 0.0
        %1797 = vmatprep.mubr.f32.mxu0 0.0
        %1798 = vmatmul.mubr.f32.gmra.mrb[0].mxu0 %v1731
        %v1799 = vpop.f32.mrb[0].mxu0
        %v1800 = vadd.f32 0.0, %v1799
        %v1801 = vpop.f32.mrb[0].mxu0
        %1802 = vdwg.mxu0
        %s1803 = scalar_lea.vmem %s9, 32
        %v1804 = vld [vmem:[%s1803] sm:$0xff]
        %v1805 = vld [vmem:[%s1803 + $0x8] sm:$0xff]
        %v1807 = vsel %vm672, %v1800, 0
        %1809 = vmatprep.subr.mxu0 0.0
        %1810 = vmatpush1.msra.mxu0 %v1804
        %1811 = vmatprep.subr.mxu0 0.0
        %1812 = vmatpush1.msra.mxu0 %v1805
        %1813 = vmatprep.subr.mxu0 0.0
        %1814 = vmatpush1.msra.mxu0 0.0
        %1815 = vmatprep.subr.mxu0 0.0
        %1816 = vmatpush1.msra.mxu0 0.0
        %1817 = vmatprep.subr.mxu0 0.0
        %1818 = vmatpush1.msra.mxu0 0.0
        %1819 = vmatprep.subr.mxu0 0.0
        %1820 = vmatpush1.msra.mxu0 0.0
        %1821 = vmatprep.subr.mxu0 0.0
        %1822 = vmatpush1.msra.mxu0 0.0
        %1823 = vmatprep.subr.mxu0 0.0
        %1824 = vmatpush1.msra.mxu0 0.0
        %1825 = vmatprep.subr.mxu0 0.0
        %1826 = vmatpush1.msra.mxu0 0.0
        %1827 = vmatprep.subr.mxu0 0.0
        %1828 = vmatpush1.msra.mxu0 0.0
        %1829 = vmatprep.subr.mxu0 0.0
        %1830 = vmatpush1.msra.mxu0 0.0
        %1831 = vmatprep.subr.mxu0 0.0
        %1832 = vmatpush1.msra.mxu0 0.0
        %1833 = vmatprep.subr.mxu0 0.0
        %1834 = vmatpush1.msra.mxu0 0.0
        %1835 = vmatprep.subr.mxu0 0.0
        %1836 = vmatpush1.msra.mxu0 0.0
        %1837 = vmatprep.subr.mxu0 0.0
        %1838 = vmatpush1.msra.mxu0 0.0
        %1839 = vmatprep.subr.mxu0 0.0
        %1840 = vmatpush1.msra.mxu0 0.0
        %1841 = vmatprep.subr.mxu0 0.0
        %1842 = vmatpush1.msra.mxu0 0.0
        %1843 = vmatprep.subr.mxu0 0.0
        %1844 = vmatpush1.msra.mxu0 0.0
        %1845 = vmatprep.subr.mxu0 0.0
        %1846 = vmatpush1.msra.mxu0 0.0
        %1847 = vmatprep.subr.mxu0 0.0
        %1848 = vmatpush1.msra.mxu0 0.0
        %1849 = vmatprep.subr.mxu0 0.0
        %1850 = vmatpush1.msra.mxu0 0.0
        %1851 = vmatprep.subr.mxu0 0.0
        %1852 = vmatpush1.msra.mxu0 0.0
        %1853 = vmatprep.subr.mxu0 0.0
        %1854 = vmatpush1.msra.mxu0 0.0
        %1855 = vmatprep.subr.mxu0 0.0
        %1856 = vmatpush1.msra.mxu0 0.0
        %1857 = vmatprep.subr.mxu0 0.0
        %1858 = vmatpush1.msra.mxu0 0.0
        %1859 = vmatprep.subr.mxu0 0.0
        %1860 = vmatpush1.msra.mxu0 0.0
        %1861 = vmatprep.subr.mxu0 0.0
        %1862 = vmatpush1.msra.mxu0 0.0
        %1863 = vmatprep.subr.mxu0 0.0
        %1864 = vmatpush1.msra.mxu0 0.0
        %1865 = vmatprep.subr.mxu0 0.0
        %1866 = vmatpush1.msra.mxu0 0.0
        %1867 = vmatprep.subr.mxu0 0.0
        %1868 = vmatpush1.msra.mxu0 0.0
        %1869 = vmatprep.subr.mxu0 0.0
        %1870 = vmatpush1.msra.mxu0 0.0
        %1871 = vmatprep.subr.mxu0 0.0
        %1872 = vmatpush1.msra.mxu0 0.0
        %1873 = vmatprep.mubr.f32.mxu0 0.0
        %1874 = vmatmul.mubr.f32.gmra.mrb[0].mxu0 %v1807
        %v1875 = vpop.f32.mrb[0].mxu0
        %v1876 = vadd.f32 0.0, %v1875
        %v1877 = vpop.f32.mrb[0].mxu0
        %1878 = vdwg.mxu0
        %v1879 = vadd.f32 %v1391, %v1876
        %s1880 = scalar_lea.vmem %s3, 96
        %v1881 = vld [vmem:[%s1880] sm:$0xff]
        %v1882 = vld [vmem:[%s1880 + $0x8] sm:$0xff]
        %v1883 = vld [vmem:[%s1880 + $0x10] sm:$0xff]
        %v1884 = vld [vmem:[%s1880 + $0x18] sm:$0xff]
        %s1885 = scalar_lea.vmem %s4, 3
        %v1886 = vld [vmem:[%s1885] sm:$0x1]
        %v1888 = vlaneseq
        %v1889 = vshrl.u32 %v1888, 7
        %v1890 = vsub.s32 0, %v1889
        %v1891 = vrot.slane %v1886, %v1890
        %1893 = vmatprep.subr.mxu0 0.0
        %1894 = vmatpush1.msra.mxu0 %v1881
        %1895 = vmatprep.subr.mxu0 0.0
        %1896 = vmatpush1.msra.mxu0 %v1882
        %1897 = vmatprep.subr.mxu0 0.0
        %1898 = vmatpush1.msra.mxu0 %v1883
        %1899 = vmatprep.subr.mxu0 0.0
        %1900 = vmatpush1.msra.mxu0 %v1884
        %1901 = vmatprep.subr.mxu0 0.0
        %1902 = vmatpush1.msra.mxu0 0.0
        %1903 = vmatprep.subr.mxu0 0.0
        %1904 = vmatpush1.msra.mxu0 0.0
        %1905 = vmatprep.subr.mxu0 0.0
        %1906 = vmatpush1.msra.mxu0 0.0
        %1907 = vmatprep.subr.mxu0 0.0
        %1908 = vmatpush1.msra.mxu0 0.0
        %1909 = vmatprep.subr.mxu0 0.0
        %1910 = vmatpush1.msra.mxu0 0.0
        %1911 = vmatprep.subr.mxu0 0.0
        %1912 = vmatpush1.msra.mxu0 0.0
        %1913 = vmatprep.subr.mxu0 0.0
        %1914 = vmatpush1.msra.mxu0 0.0
        %1915 = vmatprep.subr.mxu0 0.0
        %1916 = vmatpush1.msra.mxu0 0.0
        %1917 = vmatprep.subr.mxu0 0.0
        %1918 = vmatpush1.msra.mxu0 0.0
        %1919 = vmatprep.subr.mxu0 0.0
        %1920 = vmatpush1.msra.mxu0 0.0
        %1921 = vmatprep.subr.mxu0 0.0
        %1922 = vmatpush1.msra.mxu0 0.0
        %1923 = vmatprep.subr.mxu0 0.0
        %1924 = vmatpush1.msra.mxu0 0.0
        %1925 = vmatprep.subr.mxu0 0.0
        %1926 = vmatpush1.msra.mxu0 0.0
        %1927 = vmatprep.subr.mxu0 0.0
        %1928 = vmatpush1.msra.mxu0 0.0
        %1929 = vmatprep.subr.mxu0 0.0
        %1930 = vmatpush1.msra.mxu0 0.0
        %1931 = vmatprep.subr.mxu0 0.0
        %1932 = vmatpush1.msra.mxu0 0.0
        %1933 = vmatprep.subr.mxu0 0.0
        %1934 = vmatpush1.msra.mxu0 0.0
        %1935 = vmatprep.subr.mxu0 0.0
        %1936 = vmatpush1.msra.mxu0 0.0
        %1937 = vmatprep.subr.mxu0 0.0
        %1938 = vmatpush1.msra.mxu0 0.0
        %1939 = vmatprep.subr.mxu0 0.0
        %1940 = vmatpush1.msra.mxu0 0.0
        %1941 = vmatprep.subr.mxu0 0.0
        %1942 = vmatpush1.msra.mxu0 0.0
        %1943 = vmatprep.subr.mxu0 0.0
        %1944 = vmatpush1.msra.mxu0 0.0
        %1945 = vmatprep.subr.mxu0 0.0
        %1946 = vmatpush1.msra.mxu0 0.0
        %1947 = vmatprep.subr.mxu0 0.0
        %1948 = vmatpush1.msra.mxu0 0.0
        %1949 = vmatprep.subr.mxu0 0.0
        %1950 = vmatpush1.msra.mxu0 0.0
        %1951 = vmatprep.subr.mxu0 0.0
        %1952 = vmatpush1.msra.mxu0 0.0
        %1953 = vmatprep.subr.mxu0 0.0
        %1954 = vmatpush1.msra.mxu0 0.0
        %1955 = vmatprep.subr.mxu0 0.0
        %1956 = vmatpush1.msra.mxu0 0.0
        %1957 = vmatprep.mubr.f32.mxu0 0.0
        %1958 = vmatmul.mubr.f32.gmra.mrb[0].mxu0 %v432
        %v1959 = vpop.f32.mrb[0].mxu0
        %v1960 = vadd.f32 %v1891, %v1959
        %v1961 = vpop.f32.mrb[0].mxu0
        %1962 = vdwg.mxu0
        %s1963 = scalar_lea.vmem %s5, 96
        %v1964 = vld [vmem:[%s1963] sm:$0xff]
        %v1965 = vld [vmem:[%s1963 + $0x8] sm:$0xff]
        %v1966 = vld [vmem:[%s1963 + $0x10] sm:$0xff]
        %v1967 = vld [vmem:[%s1963 + $0x18] sm:$0xff]
        %s1968 = scalar_lea.vmem %s6, 3
        %v1969 = vld [vmem:[%s1968] sm:$0x1]
        %v1971 = vlaneseq
        %v1972 = vshrl.u32 %v1971, 7
        %v1973 = vsub.s32 0, %v1972
        %v1974 = vrot.slane %v1969, %v1973
        %1976 = vmatprep.subr.mxu0 0.0
        %1977 = vmatpush1.msra.mxu0 %v1964
        %1978 = vmatprep.subr.mxu0 0.0
        %1979 = vmatpush1.msra.mxu0 %v1965
        %1980 = vmatprep.subr.mxu0 0.0
        %1981 = vmatpush1.msra.mxu0 %v1966
        %1982 = vmatprep.subr.mxu0 0.0
        %1983 = vmatpush1.msra.mxu0 %v1967
        %1984 = vmatprep.subr.mxu0 0.0
        %1985 = vmatpush1.msra.mxu0 0.0
        %1986 = vmatprep.subr.mxu0 0.0
        %1987 = vmatpush1.msra.mxu0 0.0
        %1988 = vmatprep.subr.mxu0 0.0
        %1989 = vmatpush1.msra.mxu0 0.0
        %1990 = vmatprep.subr.mxu0 0.0
        %1991 = vmatpush1.msra.mxu0 0.0
        %1992 = vmatprep.subr.mxu0 0.0
        %1993 = vmatpush1.msra.mxu0 0.0
        %1994 = vmatprep.subr.mxu0 0.0
        %1995 = vmatpush1.msra.mxu0 0.0
        %1996 = vmatprep.subr.mxu0 0.0
        %1997 = vmatpush1.msra.mxu0 0.0
        %1998 = vmatprep.subr.mxu0 0.0
        %1999 = vmatpush1.msra.mxu0 0.0
        %2000 = vmatprep.subr.mxu0 0.0
        %2001 = vmatpush1.msra.mxu0 0.0
        %2002 = vmatprep.subr.mxu0 0.0
        %2003 = vmatpush1.msra.mxu0 0.0
        %2004 = vmatprep.subr.mxu0 0.0
        %2005 = vmatpush1.msra.mxu0 0.0
        %2006 = vmatprep.subr.mxu0 0.0
        %2007 = vmatpush1.msra.mxu0 0.0
        %2008 = vmatprep.subr.mxu0 0.0
        %2009 = vmatpush1.msra.mxu0 0.0
        %2010 = vmatprep.subr.mxu0 0.0
        %2011 = vmatpush1.msra.mxu0 0.0
        %2012 = vmatprep.subr.mxu0 0.0
        %2013 = vmatpush1.msra.mxu0 0.0
        %2014 = vmatprep.subr.mxu0 0.0
        %2015 = vmatpush1.msra.mxu0 0.0
        %2016 = vmatprep.subr.mxu0 0.0
        %2017 = vmatpush1.msra.mxu0 0.0
        %2018 = vmatprep.subr.mxu0 0.0
        %2019 = vmatpush1.msra.mxu0 0.0
        %2020 = vmatprep.subr.mxu0 0.0
        %2021 = vmatpush1.msra.mxu0 0.0
        %2022 = vmatprep.subr.mxu0 0.0
        %2023 = vmatpush1.msra.mxu0 0.0
        %2024 = vmatprep.subr.mxu0 0.0
        %2025 = vmatpush1.msra.mxu0 0.0
        %2026 = vmatprep.subr.mxu0 0.0
        %2027 = vmatpush1.msra.mxu0 0.0
        %2028 = vmatprep.subr.mxu0 0.0
        %2029 = vmatpush1.msra.mxu0 0.0
        %2030 = vmatprep.subr.mxu0 0.0
        %2031 = vmatpush1.msra.mxu0 0.0
        %2032 = vmatprep.subr.mxu0 0.0
        %2033 = vmatpush1.msra.mxu0 0.0
        %2034 = vmatprep.subr.mxu0 0.0
        %2035 = vmatpush1.msra.mxu0 0.0
        %2036 = vmatprep.subr.mxu0 0.0
        %2037 = vmatpush1.msra.mxu0 0.0
        %2038 = vmatprep.subr.mxu0 0.0
        %2039 = vmatpush1.msra.mxu0 0.0
        %2040 = vmatprep.mubr.f32.mxu0 0.0
        %2041 = vmatmul.mubr.f32.gmra.mrb[0].mxu0 %v516
        %v2042 = vpop.f32.mrb[0].mxu0
        %v2043 = vadd.f32 %v1974, %v2042
        %v2044 = vpop.f32.mrb[0].mxu0
        %2045 = vdwg.mxu0
        %s2046 = scalar_lea.vmem %s7, 96
        %v2047 = vld [vmem:[%s2046] sm:$0xff]
        %v2048 = vld [vmem:[%s2046 + $0x8] sm:$0xff]
        %v2049 = vld [vmem:[%s2046 + $0x10] sm:$0xff]
        %v2050 = vld [vmem:[%s2046 + $0x18] sm:$0xff]
        %s2051 = scalar_lea.vmem %s8, 3
        %v2052 = vld [vmem:[%s2051] sm:$0x1]
        %v2054 = vlaneseq
        %v2055 = vshrl.u32 %v2054, 7
        %v2056 = vsub.s32 0, %v2055
        %v2057 = vrot.slane %v2052, %v2056
        %2059 = vmatprep.subr.mxu0 0.0
        %2060 = vmatpush1.msra.mxu0 %v2047
        %2061 = vmatprep.subr.mxu0 0.0
        %2062 = vmatpush1.msra.mxu0 %v2048
        %2063 = vmatprep.subr.mxu0 0.0
        %2064 = vmatpush1.msra.mxu0 %v2049
        %2065 = vmatprep.subr.mxu0 0.0
        %2066 = vmatpush1.msra.mxu0 %v2050
        %2067 = vmatprep.subr.mxu0 0.0
        %2068 = vmatpush1.msra.mxu0 0.0
        %2069 = vmatprep.subr.mxu0 0.0
        %2070 = vmatpush1.msra.mxu0 0.0
        %2071 = vmatprep.subr.mxu0 0.0
        %2072 = vmatpush1.msra.mxu0 0.0
        %2073 = vmatprep.subr.mxu0 0.0
        %2074 = vmatpush1.msra.mxu0 0.0
        %2075 = vmatprep.subr.mxu0 0.0
        %2076 = vmatpush1.msra.mxu0 0.0
        %2077 = vmatprep.subr.mxu0 0.0
        %2078 = vmatpush1.msra.mxu0 0.0
        %2079 = vmatprep.subr.mxu0 0.0
        %2080 = vmatpush1.msra.mxu0 0.0
        %2081 = vmatprep.subr.mxu0 0.0
        %2082 = vmatpush1.msra.mxu0 0.0
        %2083 = vmatprep.subr.mxu0 0.0
        %2084 = vmatpush1.msra.mxu0 0.0
        %2085 = vmatprep.subr.mxu0 0.0
        %2086 = vmatpush1.msra.mxu0 0.0
        %2087 = vmatprep.subr.mxu0 0.0
        %2088 = vmatpush1.msra.mxu0 0.0
        %2089 = vmatprep.subr.mxu0 0.0
        %2090 = vmatpush1.msra.mxu0 0.0
        %2091 = vmatprep.subr.mxu0 0.0
        %2092 = vmatpush1.msra.mxu0 0.0
        %2093 = vmatprep.subr.mxu0 0.0
        %2094 = vmatpush1.msra.mxu0 0.0
        %2095 = vmatprep.subr.mxu0 0.0
        %2096 = vmatpush1.msra.mxu0 0.0
        %2097 = vmatprep.subr.mxu0 0.0
        %2098 = vmatpush1.msra.mxu0 0.0
        %2099 = vmatprep.subr.mxu0 0.0
        %2100 = vmatpush1.msra.mxu0 0.0
        %2101 = vmatprep.subr.mxu0 0.0
        %2102 = vmatpush1.msra.mxu0 0.0
        %2103 = vmatprep.subr.mxu0 0.0
        %2104 = vmatpush1.msra.mxu0 0.0
        %2105 = vmatprep.subr.mxu0 0.0
        %2106 = vmatpush1.msra.mxu0 0.0
        %2107 = vmatprep.subr.mxu0 0.0
        %2108 = vmatpush1.msra.mxu0 0.0
        %2109 = vmatprep.subr.mxu0 0.0
        %2110 = vmatpush1.msra.mxu0 0.0
        %2111 = vmatprep.subr.mxu0 0.0
        %2112 = vmatpush1.msra.mxu0 0.0
        %2113 = vmatprep.subr.mxu0 0.0
        %2114 = vmatpush1.msra.mxu0 0.0
        %2115 = vmatprep.subr.mxu0 0.0
        %2116 = vmatpush1.msra.mxu0 0.0
        %2117 = vmatprep.subr.mxu0 0.0
        %2118 = vmatpush1.msra.mxu0 0.0
        %2119 = vmatprep.subr.mxu0 0.0
        %2120 = vmatpush1.msra.mxu0 0.0
        %2121 = vmatprep.subr.mxu0 0.0
        %2122 = vmatpush1.msra.mxu0 0.0
        %2123 = vmatprep.mubr.f32.mxu0 0.0
        %2124 = vmatmul.mubr.f32.gmra.mrb[0].mxu0 %v600
        %v2125 = vpop.f32.mrb[0].mxu0
        %v2126 = vadd.f32 %v2057, %v2125
        %v2127 = vpop.f32.mrb[0].mxu0
        %2128 = vdwg.mxu0
        %v2130 = vsel %vm672, %v1960, 0
        %v2133 = vsel %vm672, %v2043, 0
        %2135 = vmatprep.subr.mxu0 0.0
        %2136 = vmatpush1.xpose.msra.mxu0 %v2133
        %2137 = vmatprep.subr.mxu0 0.0
        %2138 = vmatpush1.xpose.msra.mxu0 0.0
        %2139 = vmatprep.subr.mxu0 0.0
        %2140 = vmatpush1.xpose.msra.mxu0 0.0
        %2141 = vmatprep.subr.mxu0 0.0
        %2142 = vmatpush1.xpose.msra.mxu0 0.0
        %2143 = vmatprep.subr.mxu0 0.0
        %2144 = vmatpush1.xpose.msra.mxu0 0.0
        %2145 = vmatprep.subr.mxu0 0.0
        %2146 = vmatpush1.xpose.msra.mxu0 0.0
        %2147 = vmatprep.subr.mxu0 0.0
        %2148 = vmatpush1.xpose.msra.mxu0 0.0
        %2149 = vmatprep.subr.mxu0 0.0
        %2150 = vmatpush1.xpose.msra.mxu0 0.0
        %2151 = vmatprep.subr.mxu0 0.0
        %2152 = vmatpush1.xpose.msra.mxu0 0.0
        %2153 = vmatprep.subr.mxu0 0.0
        %2154 = vmatpush1.xpose.msra.mxu0 0.0
        %2155 = vmatprep.subr.mxu0 0.0
        %2156 = vmatpush1.xpose.msra.mxu0 0.0
        %2157 = vmatprep.subr.mxu0 0.0
        %2158 = vmatpush1.xpose.msra.mxu0 0.0
        %2159 = vmatprep.subr.mxu0 0.0
        %2160 = vmatpush1.xpose.msra.mxu0 0.0
        %2161 = vmatprep.subr.mxu0 0.0
        %2162 = vmatpush1.xpose.msra.mxu0 0.0
        %2163 = vmatprep.subr.mxu0 0.0
        %2164 = vmatpush1.xpose.msra.mxu0 0.0
        %2165 = vmatprep.subr.mxu0 0.0
        %2166 = vmatpush1.xpose.msra.mxu0 0.0
        %2167 = vmatprep.subr.mxu0 0.0
        %2168 = vmatpush1.xpose.msra.mxu0 0.0
        %2169 = vmatprep.subr.mxu0 0.0
        %2170 = vmatpush1.xpose.msra.mxu0 0.0
        %2171 = vmatprep.subr.mxu0 0.0
        %2172 = vmatpush1.xpose.msra.mxu0 0.0
        %2173 = vmatprep.subr.mxu0 0.0
        %2174 = vmatpush1.xpose.msra.mxu0 0.0
        %2175 = vmatprep.subr.mxu0 0.0
        %2176 = vmatpush1.xpose.msra.mxu0 0.0
        %2177 = vmatprep.subr.mxu0 0.0
        %2178 = vmatpush1.xpose.msra.mxu0 0.0
        %2179 = vmatprep.subr.mxu0 0.0
        %2180 = vmatpush1.xpose.msra.mxu0 0.0
        %2181 = vmatprep.subr.mxu0 0.0
        %2182 = vmatpush1.xpose.msra.mxu0 0.0
        %2183 = vmatprep.subr.mxu0 0.0
        %2184 = vmatpush1.xpose.msra.mxu0 0.0
        %2185 = vmatprep.subr.mxu0 0.0
        %2186 = vmatpush1.xpose.msra.mxu0 0.0
        %2187 = vmatprep.subr.mxu0 0.0
        %2188 = vmatpush1.xpose.msra.mxu0 0.0
        %2189 = vmatprep.subr.mxu0 0.0
        %2190 = vmatpush1.xpose.msra.mxu0 0.0
        %2191 = vmatprep.subr.mxu0 0.0
        %2192 = vmatpush1.xpose.msra.mxu0 0.0
        %2193 = vmatprep.subr.mxu0 0.0
        %2194 = vmatpush1.xpose.msra.mxu0 0.0
        %2195 = vmatprep.subr.mxu0 0.0
        %2196 = vmatpush1.xpose.msra.mxu0 0.0
        %2197 = vmatprep.subr.mxu0 0.0
        %2198 = vmatpush1.xpose.msra.mxu0 0.0
        %2199 = vmatprep.mubr.f32.mxu0 0.0
        %2200 = vmatmul.mubr.f32.gmra.mrb[0].mxu0 %v2130
        %v2201 = vpop.f32.mrb[0].mxu0
        %v2202 = vadd.f32 0.0, %v2201
        %v2203 = vpop.f32.mrb[0].mxu0
        %2204 = vdwg.mxu0
        %v2205 = vsel %vm749, %v2202, -inf
        %2206 = vmax.xlane.f32.xlu0 %v2205
        %v2207 = vpop.xlane.xlu0 %2206
        %v2208 = vsub.f32 %v2202, %v2207
        %v2209 = vmul.f32 %v2208, 1.442695
        %v2210 = vpow.pop %v2209
        %v2211 = vsel %vm749, %v2210, 0.0
        %2212 = vadd.xlane.f32.xlu0 %v2211
        %v2213 = vpop.xlane.xlu0 %2212
        %v2214 = vrcp.pop %v2213
        %v2215 = vmul.f32 %v2210, %v2214
        %v2217 = vsel %vm749, %v2215, 0
        %2219 = vmatprep.subr.mxu0 0.0
        %2220 = vmatpush1.msra.mxu0 %v2126
        %2221 = vmatprep.subr.mxu0 0.0
        %2222 = vmatpush1.msra.mxu0 0.0
        %2223 = vmatprep.subr.mxu0 0.0
        %2224 = vmatpush1.msra.mxu0 0.0
        %2225 = vmatprep.subr.mxu0 0.0
        %2226 = vmatpush1.msra.mxu0 0.0
        %2227 = vmatprep.subr.mxu0 0.0
        %2228 = vmatpush1.msra.mxu0 0.0
        %2229 = vmatprep.subr.mxu0 0.0
        %2230 = vmatpush1.msra.mxu0 0.0
        %2231 = vmatprep.subr.mxu0 0.0
        %2232 = vmatpush1.msra.mxu0 0.0
        %2233 = vmatprep.subr.mxu0 0.0
        %2234 = vmatpush1.msra.mxu0 0.0
        %2235 = vmatprep.subr.mxu0 0.0
        %2236 = vmatpush1.msra.mxu0 0.0
        %2237 = vmatprep.subr.mxu0 0.0
        %2238 = vmatpush1.msra.mxu0 0.0
        %2239 = vmatprep.subr.mxu0 0.0
        %2240 = vmatpush1.msra.mxu0 0.0
        %2241 = vmatprep.subr.mxu0 0.0
        %2242 = vmatpush1.msra.mxu0 0.0
        %2243 = vmatprep.subr.mxu0 0.0
        %2244 = vmatpush1.msra.mxu0 0.0
        %2245 = vmatprep.subr.mxu0 0.0
        %2246 = vmatpush1.msra.mxu0 0.0
        %2247 = vmatprep.subr.mxu0 0.0
        %2248 = vmatpush1.msra.mxu0 0.0
        %2249 = vmatprep.subr.mxu0 0.0
        %2250 = vmatpush1.msra.mxu0 0.0
        %2251 = vmatprep.subr.mxu0 0.0
        %2252 = vmatpush1.msra.mxu0 0.0
        %2253 = vmatprep.subr.mxu0 0.0
        %2254 = vmatpush1.msra.mxu0 0.0
        %2255 = vmatprep.subr.mxu0 0.0
        %2256 = vmatpush1.msra.mxu0 0.0
        %2257 = vmatprep.subr.mxu0 0.0
        %2258 = vmatpush1.msra.mxu0 0.0
        %2259 = vmatprep.subr.mxu0 0.0
        %2260 = vmatpush1.msra.mxu0 0.0
        %2261 = vmatprep.subr.mxu0 0.0
        %2262 = vmatpush1.msra.mxu0 0.0
        %2263 = vmatprep.subr.mxu0 0.0
        %2264 = vmatpush1.msra.mxu0 0.0
        %2265 = vmatprep.subr.mxu0 0.0
        %2266 = vmatpush1.msra.mxu0 0.0
        %2267 = vmatprep.subr.mxu0 0.0
        %2268 = vmatpush1.msra.mxu0 0.0
        %2269 = vmatprep.subr.mxu0 0.0
        %2270 = vmatpush1.msra.mxu0 0.0
        %2271 = vmatprep.subr.mxu0 0.0
        %2272 = vmatpush1.msra.mxu0 0.0
        %2273 = vmatprep.subr.mxu0 0.0
        %2274 = vmatpush1.msra.mxu0 0.0
        %2275 = vmatprep.subr.mxu0 0.0
        %2276 = vmatpush1.msra.mxu0 0.0
        %2277 = vmatprep.subr.mxu0 0.0
        %2278 = vmatpush1.msra.mxu0 0.0
        %2279 = vmatprep.subr.mxu0 0.0
        %2280 = vmatpush1.msra.mxu0 0.0
        %2281 = vmatprep.subr.mxu0 0.0
        %2282 = vmatpush1.msra.mxu0 0.0
        %2283 = vmatprep.mubr.f32.mxu0 0.0
        %2284 = vmatmul.mubr.f32.gmra.mrb[0].mxu0 %v2217
        %v2285 = vpop.f32.mrb[0].mxu0
        %v2286 = vadd.f32 0.0, %v2285
        %v2287 = vpop.f32.mrb[0].mxu0
        %2288 = vdwg.mxu0
        %s2289 = scalar_lea.vmem %s9, 48
        %v2290 = vld [vmem:[%s2289] sm:$0xff]
        %v2291 = vld [vmem:[%s2289 + $0x8] sm:$0xff]
        %v2293 = vsel %vm672, %v2286, 0
        %2295 = vmatprep.subr.mxu0 0.0
        %2296 = vmatpush1.msra.mxu0 %v2290
        %2297 = vmatprep.subr.mxu0 0.0
        %2298 = vmatpush1.msra.mxu0 %v2291
        %2299 = vmatprep.subr.mxu0 0.0
        %2300 = vmatpush1.msra.mxu0 0.0
        %2301 = vmatprep.subr.mxu0 0.0
        %2302 = vmatpush1.msra.mxu0 0.0
        %2303 = vmatprep.subr.mxu0 0.0
        %2304 = vmatpush1.msra.mxu0 0.0
        %2305 = vmatprep.subr.mxu0 0.0
        %2306 = vmatpush1.msra.mxu0 0.0
        %2307 = vmatprep.subr.mxu0 0.0
        %2308 = vmatpush1.msra.mxu0 0.0
        %2309 = vmatprep.subr.mxu0 0.0
        %2310 = vmatpush1.msra.mxu0 0.0
        %2311 = vmatprep.subr.mxu0 0.0
        %2312 = vmatpush1.msra.mxu0 0.0
        %2313 = vmatprep.subr.mxu0 0.0
        %2314 = vmatpush1.msra.mxu0 0.0
        %2315 = vmatprep.subr.mxu0 0.0
        %2316 = vmatpush1.msra.mxu0 0.0
        %2317 = vmatprep.subr.mxu0 0.0
        %2318 = vmatpush1.msra.mxu0 0.0
        %2319 = vmatprep.subr.mxu0 0.0
        %2320 = vmatpush1.msra.mxu0 0.0
        %2321 = vmatprep.subr.mxu0 0.0
        %2322 = vmatpush1.msra.mxu0 0.0
        %2323 = vmatprep.subr.mxu0 0.0
        %2324 = vmatpush1.msra.mxu0 0.0
        %2325 = vmatprep.subr.mxu0 0.0
        %2326 = vmatpush1.msra.mxu0 0.0
        %2327 = vmatprep.subr.mxu0 0.0
        %2328 = vmatpush1.msra.mxu0 0.0
        %2329 = vmatprep.subr.mxu0 0.0
        %2330 = vmatpush1.msra.mxu0 0.0
        %2331 = vmatprep.subr.mxu0 0.0
        %2332 = vmatpush1.msra.mxu0 0.0
        %2333 = vmatprep.subr.mxu0 0.0
        %2334 = vmatpush1.msra.mxu0 0.0
        %2335 = vmatprep.subr.mxu0 0.0
        %2336 = vmatpush1.msra.mxu0 0.0
        %2337 = vmatprep.subr.mxu0 0.0
        %2338 = vmatpush1.msra.mxu0 0.0
        %2339 = vmatprep.subr.mxu0 0.0
        %2340 = vmatpush1.msra.mxu0 0.0
        %2341 = vmatprep.subr.mxu0 0.0
        %2342 = vmatpush1.msra.mxu0 0.0
        %2343 = vmatprep.subr.mxu0 0.0
        %2344 = vmatpush1.msra.mxu0 0.0
        %2345 = vmatprep.subr.mxu0 0.0
        %2346 = vmatpush1.msra.mxu0 0.0
        %2347 = vmatprep.subr.mxu0 0.0
        %2348 = vmatpush1.msra.mxu0 0.0
        %2349 = vmatprep.subr.mxu0 0.0
        %2350 = vmatpush1.msra.mxu0 0.0
        %2351 = vmatprep.subr.mxu0 0.0
        %2352 = vmatpush1.msra.mxu0 0.0
        %2353 = vmatprep.subr.mxu0 0.0
        %2354 = vmatpush1.msra.mxu0 0.0
        %2355 = vmatprep.subr.mxu0 0.0
        %2356 = vmatpush1.msra.mxu0 0.0
        %2357 = vmatprep.subr.mxu0 0.0
        %2358 = vmatpush1.msra.mxu0 0.0
        %2359 = vmatprep.mubr.f32.mxu0 0.0
        %2360 = vmatmul.mubr.f32.gmra.mrb[0].mxu0 %v2293
        %v2361 = vpop.f32.mrb[0].mxu0
        %v2362 = vadd.f32 0.0, %v2361
        %v2363 = vpop.f32.mrb[0].mxu0
        %2364 = vdwg.mxu0
        %v2365 = vadd.f32 %v1879, %v2362
        %v2366 = vld [vmem:[%s10] sm:$0x1]
        %v2368 = vlaneseq
        %v2369 = vshrl.u32 %v2368, 7
        %v2370 = vsub.s32 0, %v2369
        %v2371 = vrot.slane %v2366, %v2370
        %v2373 = vadd.f32 %v2365, %v2371
        %2374 = vst [vmem:[%s403] sm:$0xff] %v2373
        %s2375 = sand.u32 %s279, 1
        %s2376 = scalar_lea.sflag [#allocation3], %s2375
        %s2377 = sand.u32 %s279, 1
        %s2378 = smul.addr %s2377, 8
        %s2379 = scalar_lea.vmem [#allocation2], %s2378
        // Predicated region
        $region65: #{tpu_custom_call.1} parent=63 // pred_check
          %p2380 = pneg %p289
        $region66: #{tpu_custom_call.1} parent=63 // pred_check_branch
          %2382 = sbr.rel (%p2380) target = $region68
        $region67: #{tpu_custom_call.1} parent=63 // pred_region
          %s2384 = ssub.s32 128, 128
          %2385 = vsyncadd %s2376, %s2384
          %s2386 = smul.addr %s25, 128
          %s2387 = scalar_lea.hbm %s11, %s2386
          %s2389 = sshll.u32 %s2379, 4
          %s2390 = int_to_ptr.vmem [resolvable:$true] %s2389
          %2392 = dma.vmem_to_hbm [thread:$0]  %s2390, 128, %s2387, %s2376
        $region68: #{tpu_custom_call.1} parent=63 // pred_fallthru
          _
      $region64: #{tpu_custom_call.1} parent=5 // pred_fallthru
        _
      %p2393 = scmp.le.s32.totalorder 2, %s20
      // Predicated region
      $region69: #{tpu_custom_call.1} parent=5 // pred_check
        %p2394 = pneg %p2393
      $region70: #{tpu_custom_call.1} parent=5 // pred_check_branch
        %2396 = sbr.rel (%p2394) target = $region72
      $region71: #{tpu_custom_call.1} parent=5 // pred_region
        %s2397 = ssub.s32 %s20, 2
        // Predicated region
        $region73: #{tpu_custom_call.1} parent=71 // pred_check
          %p2398 = pneg %p295
        $region74: #{tpu_custom_call.1} parent=71 // pred_check_branch
          %2400 = sbr.rel (%p2398) target = $region76
        $region75: #{tpu_custom_call.1} parent=71 // pred_region
          %s2401 = sand.u32 %s280, 1
          %s2402 = scalar_lea.sflag [#allocation3], %s2401
          %s2403 = sand.u32 %s280, 1
          %s2404 = smul.addr %s2403, 8
          %s2405 = scalar_lea.vmem [#allocation2], %s2404
          %2406 = dma.done %s2402, 128
        $region76: #{tpu_custom_call.1} parent=71 // pred_fallthru
          _
      $region72: #{tpu_custom_call.1} parent=5 // pred_fallthru
        _
    $region6: #{tpu_custom_call.1} parent=1 // loop_footer
      %s24 = sadd.s32 1, %s20
    $region7: #{tpu_custom_call.1} parent=1 // loop_footer_branch
      %19 = sbr.rel target = $region3
    $region8: #{tpu_custom_call.1} parent=1 // loop_exit
      _
    %2407 = vsyncpa [#allocation3], 1
    %s2408 = scalar_lea.sflag [#allocation3], 1
    %2409 = vsyncpa %s2408, 1

</llo_original>
